<compile_context>
chip_gen: v5e
topology: v5e:2x2
jax: 0.10.0
libtpu: 0.0.40
codegen_flags: <defaults>
</compile_context>

<pallas_src>
import math

import jax
import jax.numpy as jnp
from jax.experimental import pallas as pl
from jax.experimental.pallas import tpu as pltpu


# ----------------------------------------------------------------------------
# VMEM budget helper (safe on v5e/v6e 128 MiB and v7x 64 MiB).
# ----------------------------------------------------------------------------
def _vmem_limit_bytes():
    try:
        cap = int(pltpu.get_tpu_info().vmem_capacity_bytes)
    except Exception:
        cap = 64 * 1024 * 1024
    return min(cap // 2, 64 * 1024 * 1024)


# ----------------------------------------------------------------------------
# Kernel 1: masked filter-prob weighting and 'avg' basket pooling.
# Tiled over users K ("parallel" so megacore shards it); embeddings arrive in
# bf16, accumulation / denominator in f32, result stored lane-dense in bf16.
# ----------------------------------------------------------------------------
def basket_pool_kernel(fp_ref, emb_ref, bemb_ref):
    # fp:   (Kt, N, M) f32, already masked by (seq != -1)
    # emb:  (Kt, N, M, H) bf16   embedding rows of seq+1 (padding row is zeros)
    # bemb: (Kt, N, H) bf16      'avg'-pooled basket embeddings
    fp = fp_ref[...]
    emb = emb_ref[...].astype(jnp.float32)
    num = jnp.sum(emb * fp[..., None], axis=2)              # (Kt, N, H) f32
    denom = jnp.sum(fp, axis=2, keepdims=True) + 1e-10      # (Kt, N, 1) f32
    inv = pl.reciprocal(denom, approx=True)                  # EUP slot, ~free
    bemb_ref[...] = (num * inv).astype(bemb_ref.dtype)


def _pick_pool_tiling(K, per_user_bytes, budget_bytes):
    """Pooling K tile: last two block dims are full-extent, so any tile size is
    legal.  Prefer exact divisors (no pad copy); otherwise pad K up."""
    if K * per_user_bytes <= budget_bytes:
        if K >= 16 and K % 2 == 0:
            return K // 2, K          # >= 2 grid steps so megacore can shard users
        return K, K
    divisors = [d for d in range(1, K)
                if K % d == 0 and d * per_user_bytes <= budget_bytes]
    if divisors:
        return max(divisors), K
    tile = max(1, budget_bytes // per_user_bytes)
    k_pad = -(-K // tile) * tile
    return tile, k_pad


def _pick_gru_tiling(K, per_user_bytes, budget_bytes):
    """GRU K tile must be a multiple of 8 when K is actually tiled (it becomes
    the sublane dim of the (Kt, 1) / (Kt, H) blocks)."""
    if K <= 8:
        return K, K
    if K * per_user_bytes <= budget_bytes:
        if K >= 16 and K % 16 == 0:
            return K // 2, K          # two parallel user tiles for megacore
        return K, K
    tile = max(8, (budget_bytes // per_user_bytes) // 8 * 8)
    k_pad = -(-K // tile) * tile
    return tile, k_pad


# ----------------------------------------------------------------------------
# Kernel 2: multi-layer GRU recurrence.
#   grid = (user tiles ["parallel"], time blocks ["arbitrary"])
#   - layer-0 input gates hoisted into one block matmul per grid step
#   - layers >= 1 use a single fused [x | h] @ (2H, 4H) matmul per step
#   - top-layer output selected at t == lengths-1
# ----------------------------------------------------------------------------
def gru_kernel(x_ref, w_ih0_ref, w_hh0_ref, b_ih0_ref, b_hh0_ref,
               w_cat_ref, b_cat_ref, len_ref, out_ref, h_scr):
    # x_ref:    (Kt, T_BLK, H) bf16   reordered basket embeddings (batch-major)
    # w_ih0:    (1, H, 3H) bf16       layer-0 input weights, gate order [r|z|n]
    # w_hh0:    (1, H, 3H) bf16       layer-0 hidden weights
    # b_ih0/b_hh0: (1, 1, 3H) f32
    # w_cat:    (max(L-1,1), 2H, 4H) bf16  layers>=1 fused [x|h] weights,
    #           column blocks [r(ih+hh) | z(ih+hh) | n_ih | n_hh]
    # b_cat:    (max(L-1,1), 1, 4H) f32    [b_ir+b_hr | b_iz+b_hz | b_in | b_hn]
    # len_ref:  (Kt, 1) int32         valid basket count per user (>= 1)
    # out_ref:  (Kt, H) f32           top-layer output at t == lengths-1
    # h_scr:    (L, Kt, H) f32        hidden state, persistent across time blocks
    t_pid = pl.program_id(1)

    @pl.when(t_pid == 0)
    def _():
        h_scr[...] = jnp.zeros_like(h_scr)
        out_ref[...] = jnp.zeros_like(out_ref)

    num_layers, kt, hidden = h_scr.shape
    t_blk = x_ref.shape[1]

    lengths = len_ref[...]                                   # (Kt, 1) int32
    out = out_ref[...]                                       # (Kt, H) f32
    hs = [h_scr[l] for l in range(num_layers)]               # f32 working copies

    # Layer-0 input gates for the whole time block: one (Kt*T, H)x(H, 3H) matmul
    # instead of T tiny ones (amortizes MXU fill/drain; exact).
    x_blk = x_ref[...]                                       # (Kt, T, H) bf16
    gi0 = jnp.dot(x_blk.reshape(kt * t_blk, hidden), w_ih0_ref[0],
                  preferred_element_type=jnp.float32)
    gi0 = gi0.reshape(kt, t_blk, 3 * hidden) + b_ih0_ref[...]

    for tt in range(t_blk):                                  # static unroll
        t = t_pid * t_blk + tt

        # Layer 0: only the recurrent matmul sits on the per-step critical path.
        h0 = hs[0]
        gh0 = jnp.dot(h0.astype(jnp.bfloat16), w_hh0_ref[0],
                      preferred_element_type=jnp.float32) + b_hh0_ref[0]
        gi0_t = gi0[:, tt, :]                                # (Kt, 3H) f32
        r = jax.nn.sigmoid(gi0_t[:, :hidden] + gh0[:, :hidden])
        z = jax.nn.sigmoid(gi0_t[:, hidden:2 * hidden] + gh0[:, hidden:2 * hidden])
        n = jnp.tanh(gi0_t[:, 2 * hidden:] + r * gh0[:, 2 * hidden:])
        h0 = (1.0 - z) * n + z * h0
        hs[0] = h0
        x = h0.astype(jnp.bfloat16)

        # Layers >= 1: one fused [x | h] @ (2H, 4H) matmul per layer.  The 4H
        # output keeps n's input/hidden parts separate so the PyTorch reset-gate
        # coupling r * (W_hn h + b_hn) stays exact.
        for l in range(1, num_layers):
            hp = hs[l]
            cat = jnp.concatenate([x, hp.astype(jnp.bfloat16)], axis=1)
            comb = jnp.dot(cat, w_cat_ref[l - 1],
                           preferred_element_type=jnp.float32) + b_cat_ref[l - 1]
            r = jax.nn.sigmoid(comb[:, :hidden])
            z = jax.nn.sigmoid(comb[:, hidden:2 * hidden])
            n = jnp.tanh(comb[:, 2 * hidden:3 * hidden] + r * comb[:, 3 * hidden:])
            h_new = (1.0 - z) * n + z * hp
            hs[l] = h_new
            x = h_new.astype(jnp.bfloat16)

        is_last = lengths == (t + 1)                         # (Kt, 1) bool
        out = jnp.where(is_last, hs[num_layers - 1], out)

    for l in range(num_layers):
        h_scr[l] = hs[l]
    out_ref[...] = out


# ----------------------------------------------------------------------------
# Wrapper: glue (embedding gather, sort/reorder) in plain JAX, hot paths in Pallas.
# ----------------------------------------------------------------------------
def generator2_forward(filter_basket_prob, input_seq_tensor, params, max_basket_size):
    (emb_table, w_ih0, w_hh0, b_ih0, b_hh0, w_cat, b_cat, num_layers) = params
    K, B = input_seq_tensor.shape
    M = max_basket_size
    N = B // M
    H = emb_table.shape[1]
    L = num_layers

    vmem_limit = _vmem_limit_bytes()

    seq = input_seq_tensor.astype(jnp.int32)
    mask = (seq != -1).astype(jnp.float32)
    fp = (filter_basket_prob.astype(jnp.float32) * mask).reshape(K, N, M)

    # bf16 gather halves HBM traffic of the materialized embedding tensor.
    # TODO(synk): fuse this row gather into the pooling kernel (scalar-prefetch
    # per-row DMA / in-kernel take on a VMEM-resident table) to remove the
    # remaining HBM round trip of the (K, N, M, H) tensor.
    emb = emb_table.astype(jnp.bfloat16)[seq + 1].reshape(K, N, M, H)

    # ---- Kernel 1: masked 'avg' basket pooling, tiled over users K ----------
    per_user_pool = 2 * (N * M * 4 + N * M * H * 2 + N * H * 2)   # double-buffered
    k_tile_p, k_pad_p = _pick_pool_tiling(K, per_user_pool, vmem_limit // 2)
    fp_p, emb_p = fp, emb
    if k_pad_p != K:
        fp_p = jnp.pad(fp, ((0, k_pad_p - K), (0, 0), (0, 0)))
        emb_p = jnp.pad(emb, ((0, k_pad_p - K), (0, 0), (0, 0), (0, 0)))

    basket_emb = pl.pallas_call(
        basket_pool_kernel,
        grid=(k_pad_p // k_tile_p,),
        in_specs=[
            pl.BlockSpec((k_tile_p, N, M), lambda i: (i, 0, 0)),
            pl.BlockSpec((k_tile_p, N, M, H), lambda i: (i, 0, 0, 0)),
        ],
        out_specs=pl.BlockSpec((k_tile_p, N, H), lambda i: (i, 0, 0)),
        out_shape=jax.ShapeDtypeStruct((k_pad_p, N, H), jnp.bfloat16),
        compiler_params=pltpu.CompilerParams(
            dimension_semantics=("parallel",),
            vmem_limit_bytes=vmem_limit),
    )(fp_p, emb_p)
    basket_emb = basket_emb[:K]

    # ---- Glue (small tensors) in plain JAX ----------------------------------
    filter_b = jnp.max(fp, axis=2)                              # (K, N)
    ifb = (filter_b > 0).astype(jnp.int32)
    indices = jnp.argsort(-ifb, axis=-1)                        # stable descending
    lengths = jnp.sum(ifb, axis=-1)
    lengths = lengths + (lengths == 0).astype(jnp.int32)
    inputs1 = jnp.take_along_axis(basket_emb, indices[:, :, None], axis=1)  # bf16

    # ---- Kernel 2: multi-layer GRU over time-blocked, batch-major input -----
    T_BLK = 32                                                  # multiple of 16 (bf16 pack)
    n_pad = -(-N // T_BLK) * T_BLK
    if n_pad != N:
        inputs1 = jnp.pad(inputs1, ((0, 0), (0, n_pad - N), (0, 0)))
    lengths_2d = lengths.reshape(K, 1).astype(jnp.int32)

    lcat = max(L - 1, 1)
    fixed_w = 2 * (2 * H * 3 * H * 2 + lcat * 2 * H * 4 * H * 2)   # weight buffers
    per_user_gru = (2 * T_BLK * H * 2 + T_BLK * 3 * H * 4
                    + (L + 1) * H * 4 + 2 * H * 4 + 16)
    gru_budget = max((vmem_limit - fixed_w) // 2, 1 << 20)
    k_tile_g, k_pad_g = _pick_gru_tiling(K, per_user_gru, gru_budget)
    if k_pad_g != K:
        inputs1 = jnp.pad(inputs1, ((0, k_pad_g - K), (0, 0), (0, 0)))
        lengths_2d = jnp.pad(lengths_2d, ((0, k_pad_g - K), (0, 0)),
                             constant_values=1)

    out = pl.pallas_call(
        gru_kernel,
        grid=(k_pad_g // k_tile_g, n_pad // T_BLK),
        in_specs=[
            pl.BlockSpec((k_tile_g, T_BLK, H), lambda k, t: (k, t, 0)),
            # Constant-index weight/bias blocks stay resident across the grid.
            # TODO(synk): single-buffer them (pipeline_mode=pl.Buffered(1)) or
            # stage once into scratch if VMEM gets tight for large H on v7x.
            pl.BlockSpec((1, H, 3 * H), lambda k, t: (0, 0, 0)),
            pl.BlockSpec((1, H, 3 * H), lambda k, t: (0, 0, 0)),
            pl.BlockSpec((1, 1, 3 * H), lambda k, t: (0, 0, 0)),
            pl.BlockSpec((1, 1, 3 * H), lambda k, t: (0, 0, 0)),
            pl.BlockSpec((lcat, 2 * H, 4 * H), lambda k, t: (0, 0, 0)),
            pl.BlockSpec((lcat, 1, 4 * H), lambda k, t: (0, 0, 0)),
            pl.BlockSpec((k_tile_g, 1), lambda k, t: (k, 0)),
        ],
        out_specs=pl.BlockSpec((k_tile_g, H), lambda k, t: (k, 0)),
        out_shape=jax.ShapeDtypeStruct((k_pad_g, H), jnp.float32),
        scratch_shapes=[pltpu.VMEM((L, k_tile_g, H), jnp.float32)],
        compiler_params=pltpu.CompilerParams(
            dimension_semantics=("parallel", "arbitrary"),
            vmem_limit_bytes=vmem_limit),
    )(inputs1, w_ih0, w_hh0, b_ih0, b_hh0, w_cat, b_cat, lengths_2d)
    return out[:K]


# ----------------------------------------------------------------------------
# GRU parameter repacking (PyTorch layout -> kernel layout).
# ----------------------------------------------------------------------------
def pack_gru_params(emb_table, gru_layers):
    L = len(gru_layers)
    H = gru_layers[0][0].shape[1]
    Wih0, Whh0, bih0, bhh0 = gru_layers[0]
    w_ih0 = Wih0.T.reshape(1, H, 3 * H).astype(jnp.bfloat16)
    w_hh0 = Whh0.T.reshape(1, H, 3 * H).astype(jnp.bfloat16)
    b_ih0 = bih0.reshape(1, 1, 3 * H).astype(jnp.float32)
    b_hh0 = bhh0.reshape(1, 1, 3 * H).astype(jnp.float32)

    w_cat_l, b_cat_l = [], []
    for (Wih, Whh, bih, bhh) in gru_layers[1:]:
        Wi, Wh = Wih.T, Whh.T                       # (H, 3H), columns [r|z|n]
        zeros = jnp.zeros((H, H), jnp.float32)
        top = jnp.concatenate([Wi[:, :2 * H], Wi[:, 2 * H:], zeros], axis=1)   # (H, 4H)
        bot = jnp.concatenate([Wh[:, :2 * H], zeros, Wh[:, 2 * H:]], axis=1)   # (H, 4H)
        w_cat_l.append(jnp.concatenate([top, bot], axis=0))                    # (2H, 4H)
        b_cat_l.append(jnp.concatenate(
            [bih[:2 * H] + bhh[:2 * H], bih[2 * H:], bhh[2 * H:]]).reshape(1, 4 * H))
    if not w_cat_l:                                  # L == 1: dummy, never used
        w_cat_l = [jnp.zeros((2 * H, 4 * H), jnp.float32)]
        b_cat_l = [jnp.zeros((1, 4 * H), jnp.float32)]
    w_cat = jnp.stack(w_cat_l).astype(jnp.bfloat16)
    b_cat = jnp.stack(b_cat_l).astype(jnp.float32)
    return (emb_table, w_ih0, w_hh0, b_ih0, b_hh0, w_cat, b_cat, L)


# ----------------------------------------------------------------------------
# Pure-JAX reference (mirrors the PyTorch forward) for correctness checking.
# ----------------------------------------------------------------------------
def reference_forward(fprob, seq, emb_table, gru_layers, M):
    K, B = seq.shape
    H = emb_table.shape[1]
    N = B // M
    mask = (seq != -1).astype(jnp.float32)
    fp = fprob * mask
    emb = emb_table[seq + 1]
    emb_f = (emb * fp[..., None]).reshape(K, N, M, H)
    fp_r = fp.reshape(K, N, M)
    basket = emb_f.sum(axis=2) / (fp_r.sum(axis=2, keepdims=True) + 1e-10)
    filter_b = fp_r.max(axis=2)
    ifb = (filter_b > 0).astype(jnp.int32)
    indices = jnp.argsort(-ifb, axis=-1)
    lengths = ifb.sum(axis=-1)
    lengths = lengths + (lengths == 0).astype(jnp.int32)
    inputs1 = jnp.take_along_axis(basket, indices[..., None], axis=1)

    hp = jax.lax.Precision.HIGHEST
    hs = [jnp.zeros((K, H), jnp.float32) for _ in gru_layers]
    outs = []
    for t in range(N):
        x = inputs1[:, t, :]
        for l, (Wih, Whh, bih, bhh) in enumerate(gru_layers):
            gi = jnp.dot(x, Wih.T, precision=hp) + bih
            gh = jnp.dot(hs[l], Whh.T, precision=hp) + bhh
            r = jax.nn.sigmoid(gi[:, :H] + gh[:, :H])
            z = jax.nn.sigmoid(gi[:, H:2 * H] + gh[:, H:2 * H])
            n = jnp.tanh(gi[:, 2 * H:] + r * gh[:, 2 * H:])
            hs[l] = (1.0 - z) * n + z * hs[l]
            x = hs[l]
        outs.append(x)
    outs = jnp.stack(outs, axis=1)
    return outs[jnp.arange(K), lengths - 1]


if __name__ == "__main__":
    # Small, forward-consistent config:
    K = 4                 # users in the batch
    M = 4                 # config.max_basket_size
    N = 20                # baskets per user (pads to 32 -> one T_BLK time block)
    B = N * M             # flattened sequence length (K x B inputs)
    H = 32                # config.embedding_dim (== GRU hidden size)
    L = 2                 # config.num_layer
    num_product = 50      # config.num_product

    key = jax.random.PRNGKey(0)
    ks = jax.random.split(key, 6)

    # Inputs: item ids with -1 padding, and filter probabilities.
    seq = jax.random.randint(ks[0], (K, B), 0, num_product)
    pad = jax.random.bernoulli(ks[1], 0.3, (K, B))
    seq = jnp.where(pad, -1, seq).astype(jnp.int32)

    fprob = jax.random.uniform(ks[2], (K, B), dtype=jnp.float32)
    drop = jax.random.bernoulli(ks[3], 0.25, (K, B))
    fprob = jnp.where(drop, 0.0, fprob)

    # Deterministic parameter init (shapes from Generator2.__init__).
    emb_table = jax.random.normal(ks[4], (num_product + 1, H), dtype=jnp.float32)
    emb_table = emb_table.at[0].set(0.0)          # padding_idx = 0

    bound = 1.0 / math.sqrt(H)
    wkeys = jax.random.split(ks[5], 4 * L)
    gru_layers = []
    for l in range(L):
        Wih = jax.random.uniform(wkeys[4 * l + 0], (3 * H, H), jnp.float32, -bound, bound)
        Whh = jax.random.uniform(wkeys[4 * l + 1], (3 * H, H), jnp.float32, -bound, bound)
        bih = jax.random.uniform(wkeys[4 * l + 2], (3 * H,), jnp.float32, -bound, bound)
        bhh = jax.random.uniform(wkeys[4 * l + 3], (3 * H,), jnp.float32, -bound, bound)
        gru_layers.append((Wih, Whh, bih, bhh))

    params = pack_gru_params(emb_table, gru_layers)

    out = generator2_forward(fprob, seq, params, M)
    out = jax.block_until_ready(out)

    ref = reference_forward(fprob, seq, emb_table, gru_layers, M)
    assert out.shape == (K, H)
    assert bool(jnp.allclose(out, ref, rtol=3e-2, atol=3e-2)), \
        float(jnp.max(jnp.abs(out - ref)))
    print("KERNEL_OK")
</pallas_src>

<mosaic_0001>
module attributes {stable_mosaic.version = 11 : i64} {
  func.func @basket_pool_kernel(%arg0: i32, %arg1: memref<4x20x4xf32, #tpu.memory_space<vmem>>, %arg2: memref<4x20x4x32xbf16, #tpu.memory_space<vmem>>, %arg3: memref<4x20x32xbf16, #tpu.memory_space<vmem>>) attributes {dimension_semantics = [#tpu.dimension_semantics<parallel>], iteration_bounds = array<i64: 1>, scalar_prefetch = 0 : i64, scratch_operands = 0 : i64, tpu.core_type = #tpu.core_type<tc>, window_params = [{transform_indices = @transform_0, window_bounds = array<i64: 4, 20, 4>}, {transform_indices = @transform_1, window_bounds = array<i64: 4, 20, 4, 32>}, {transform_indices = @transform_2, window_bounds = array<i64: 4, 20, 32>}]} {
    %c0 = arith.constant 0 : index
    %c0_0 = arith.constant 0 : index
    %c0_1 = arith.constant 0 : index
    %0 = vector.load %arg1[%c0, %c0_0, %c0_1] : memref<4x20x4xf32, #tpu.memory_space<vmem>>, vector<4x20x4xf32>
    %c0_2 = arith.constant 0 : index
    %c0_3 = arith.constant 0 : index
    %c0_4 = arith.constant 0 : index
    %c0_5 = arith.constant 0 : index
    %1 = vector.load %arg2[%c0_2, %c0_3, %c0_4, %c0_5] : memref<4x20x4x32xbf16, #tpu.memory_space<vmem>>, vector<4x20x4x32xbf16>
    %2 = arith.extf %1 : vector<4x20x4x32xbf16> to vector<4x20x4x32xf32>
    %3 = vector.shape_cast %0 : vector<4x20x4xf32> to vector<4x20x4x1xf32>
    %4 = vector.broadcast %3 : vector<4x20x4x1xf32> to vector<4x20x4x32xf32>
    %5 = arith.mulf %2, %4 : vector<4x20x4x32xf32>
    %cst = arith.constant dense<0.000000e+00> : vector<4x20x32xf32>
    %6 = vector.multi_reduction <add>, %5, %cst [2] : vector<4x20x4x32xf32> to vector<4x20x32xf32>
    %cst_6 = arith.constant dense<0.000000e+00> : vector<4x20xf32>
    %7 = vector.multi_reduction <add>, %0, %cst_6 [2] : vector<4x20x4xf32> to vector<4x20xf32>
    %8 = vector.shape_cast %7 : vector<4x20xf32> to vector<4x20x1xf32>
    %cst_7 = arith.constant 1.000000e-10 : f32
    %9 = vector.broadcast %cst_7 : f32 to vector<4x20x1xf32>
    %10 = arith.addf %8, %9 : vector<4x20x1xf32>
    %11 = tpu.reciprocal %10 {approx = true} : vector<4x20x1xf32> -> vector<4x20x1xf32>
    %12 = vector.broadcast %11 : vector<4x20x1xf32> to vector<4x20x32xf32>
    %13 = arith.mulf %6, %12 : vector<4x20x32xf32>
    %14 = arith.truncf %13 : vector<4x20x32xf32> to vector<4x20x32xbf16>
    %c0_8 = arith.constant 0 : index
    %c0_9 = arith.constant 0 : index
    %c0_10 = arith.constant 0 : index
    %15 = vector.load %arg3[%c0_8, %c0_9, %c0_10] : memref<4x20x32xbf16, #tpu.memory_space<vmem>>, vector<4x20x32xbf16>
    tpu.vector_store %arg3[%c0_8, %c0_9, %c0_10], %14 {strides = array<i32>} : memref<4x20x32xbf16, #tpu.memory_space<vmem>>, vector<4x20x32xbf16>,
    return
  }
  func.func @transform_0(%arg0: i32) -> (i32, i32, i32) {
    %c0_i32 = arith.constant 0 : i32
    %c0_i32_0 = arith.constant 0 : i32
    %c0_i32_1 = arith.constant 0 : i32
    return %arg0, %c0_i32, %c0_i32_0 : i32, i32, i32
  }
  func.func @transform_1(%arg0: i32) -> (i32, i32, i32, i32) {
    %c0_i32 = arith.constant 0 : i32
    %c0_i32_0 = arith.constant 0 : i32
    %c0_i32_1 = arith.constant 0 : i32
    %c0_i32_2 = arith.constant 0 : i32
    return %arg0, %c0_i32, %c0_i32_0, %c0_i32_1 : i32, i32, i32, i32
  }
  func.func @transform_2(%arg0: i32) -> (i32, i32, i32) {
    %c0_i32 = arith.constant 0 : i32
    %c0_i32_0 = arith.constant 0 : i32
    %c0_i32_1 = arith.constant 0 : i32
    return %arg0, %c0_i32, %c0_i32_0 : i32, i32, i32
  }
}

</mosaic_0001>

<llo_original>
// kernel: tpu_custom_call.1
$region0: #{tpu_custom_call.1}
  #allocation0 [shape = 'u32[]', space=smem, size = 0x4, offset = 0x4, fixed_abs, tag = 'smem constant byte address 0x4 - core index']
  #allocation1 [shape = 'u32[72,128]{1,0:T(1,128)}', space=vmem, size = 0x9000, scoped, tag = 'internal scratch']
  %s0 = inlined_call_operand.vmem [shape: f32[4,20,4], index: 0, kind: input, shape index: {}]
  %s1 = inlined_call_operand.hbm [shape: bf16[4,20,4,32], index: 1, kind: input, shape index: {}]
  %s2 = inlined_call_operand.vmem [shape: bf16[4,20,32], index: 2, kind: output, shape index: {}]
  %s3 = sld [smem:[#allocation0]]
  $region22: #{tpu_custom_call.1} parent=0
    _
  %s5 = ssub.s32 1, %s3
  %s6 = scalar_select 0, %s5, %s3
  $region1: #{tpu_custom_call.1} parent=0
    #allocation2 [shape = 'u8[81920]{0}', space=vmem, size = 0x14000, scoped, tag = 'input window, operand 1, single buffered']
    #allocation3 [shape = 's32[1]{0}', space=sflag, size = 0x4, scoped, tag = 'scoped memory for tpu_custom_call.1']
    %7 = vsyncpa [#allocation3], 0
    // Predicated region
    $region2: #{tpu_custom_call.1} parent=1 // pred_check
      _
    $region3: #{tpu_custom_call.1} parent=1 // pred_check_branch
      %9 = sbr.rel (0) target = $region5
    $region4: #{tpu_custom_call.1} parent=1 // pred_region
      _
    $region5: #{tpu_custom_call.1} parent=1 // pred_fallthru
      _
    // Predicated region
    $region6: #{tpu_custom_call.1} parent=1 // pred_check
      _
    $region7: #{tpu_custom_call.1} parent=1 // pred_check_branch
      %11 = sbr.rel (0) target = $region9
    $region8: #{tpu_custom_call.1} parent=1 // pred_region
      %13 = vsyncadd [#allocation3], 0
      %s14 = sshll.u32 %s1, 4
      %s15 = int_to_ptr.hbm [resolvable:$true] %s14
      %s16 = sshll.u32 [#allocation2], 4
      %s17 = int_to_ptr.vmem [resolvable:$true] %s16
      %22 = dma.hbm_to_vmem [thread:$0]  %s15, 2560, %s17, [#allocation3], 32, 32, 2
    $region9: #{tpu_custom_call.1} parent=1 // pred_fallthru
      _
    // Predicated region
    $region10: #{tpu_custom_call.1} parent=1 // pred_check
      _
    $region11: #{tpu_custom_call.1} parent=1 // pred_check_branch
      %24 = sbr.rel (0) target = $region13
    $region12: #{tpu_custom_call.1} parent=1 // pred_region
      %26 = dma.done [#allocation3], 2560
    $region13: #{tpu_custom_call.1} parent=1 // pred_fallthru
      _
    %v27 = vld [vmem:[%s0] sm:$0xff]
    %v28 = vld [vmem:[%s0 + $0x8] sm:$0xff]
    %v29 = vld [vmem:[%s0 + $0x10] sm:$0xf]
    %v30 = vld [vmem:[%s0 + $0x18] sm:$0xff]
    %v31 = vld [vmem:[%s0 + $0x20] sm:$0xff]
    %v32 = vld [vmem:[%s0 + $0x28] sm:$0xf]
    %v33 = vld [vmem:[%s0 + $0x30] sm:$0xff]
    %v34 = vld [vmem:[%s0 + $0x38] sm:$0xff]
    %v35 = vld [vmem:[%s0 + $0x40] sm:$0xf]
    %v36 = vld [vmem:[%s0 + $0x48] sm:$0xff]
    %v37 = vld [vmem:[%s0 + $0x50] sm:$0xff]
    %v38 = vld [vmem:[%s0 + $0x58] sm:$0xf]
    %v39 = vld [vmem:[#allocation2] sm:$0x3]
    %v40 = vld [vmem:[#allocation2 + $0x2] sm:$0x3]
    %v41 = vld [vmem:[#allocation2 + $0x4] sm:$0x3]
    %v42 = vld [vmem:[#allocation2 + $0x6] sm:$0x3]
    %v43 = vld [vmem:[#allocation2 + $0x8] sm:$0x3]
    %v44 = vld [vmem:[#allocation2 + $0xa] sm:$0x3]
    %v45 = vld [vmem:[#allocation2 + $0xc] sm:$0x3]
    %v46 = vld [vmem:[#allocation2 + $0xe] sm:$0x3]
    %v47 = vld [vmem:[#allocation2 + $0x10] sm:$0x3]
    %v48 = vld [vmem:[#allocation2 + $0x12] sm:$0x3]
    %v49 = vld [vmem:[#allocation2 + $0x14] sm:$0x3]
    %v50 = vld [vmem:[#allocation2 + $0x16] sm:$0x3]
    %v51 = vld [vmem:[#allocation2 + $0x18] sm:$0x3]
    %v52 = vld [vmem:[#allocation2 + $0x1a] sm:$0x3]
    %v53 = vld [vmem:[#allocation2 + $0x1c] sm:$0x3]
    %v54 = vld [vmem:[#allocation2 + $0x1e] sm:$0x3]
    %v55 = vld [vmem:[#allocation2 + $0x20] sm:$0x3]
    %v56 = vld [vmem:[#allocation2 + $0x22] sm:$0x3]
    %v57 = vld [vmem:[#allocation2 + $0x24] sm:$0x3]
    %v58 = vld [vmem:[#allocation2 + $0x26] sm:$0x3]
    %v59 = vld [vmem:[#allocation2 + $0x28] sm:$0x3]
    %v60 = vld [vmem:[#allocation2 + $0x2a] sm:$0x3]
    %v61 = vld [vmem:[#allocation2 + $0x2c] sm:$0x3]
    %v62 = vld [vmem:[#allocation2 + $0x2e] sm:$0x3]
    %v63 = vld [vmem:[#allocation2 + $0x30] sm:$0x3]
    %v64 = vld [vmem:[#allocation2 + $0x32] sm:$0x3]
    %v65 = vld [vmem:[#allocation2 + $0x34] sm:$0x3]
    %v66 = vld [vmem:[#allocation2 + $0x36] sm:$0x3]
    %v67 = vld [vmem:[#allocation2 + $0x38] sm:$0x3]
    %v68 = vld [vmem:[#allocation2 + $0x3a] sm:$0x3]
    %v69 = vld [vmem:[#allocation2 + $0x3c] sm:$0x3]
    %v70 = vld [vmem:[#allocation2 + $0x3e] sm:$0x3]
    %v71 = vld [vmem:[#allocation2 + $0x40] sm:$0x3]
    %v72 = vld [vmem:[#allocation2 + $0x42] sm:$0x3]
    %v73 = vld [vmem:[#allocation2 + $0x44] sm:$0x3]
    %v74 = vld [vmem:[#allocation2 + $0x46] sm:$0x3]
    %v75 = vld [vmem:[#allocation2 + $0x48] sm:$0x3]
    %v76 = vld [vmem:[#allocation2 + $0x4a] sm:$0x3]
    %v77 = vld [vmem:[#allocation2 + $0x4c] sm:$0x3]
    %v78 = vld [vmem:[#allocation2 + $0x4e] sm:$0x3]
    %v79 = vld [vmem:[#allocation2 + $0x50] sm:$0x3]
    %v80 = vld [vmem:[#allocation2 + $0x52] sm:$0x3]
    %v81 = vld [vmem:[#allocation2 + $0x54] sm:$0x3]
    %v82 = vld [vmem:[#allocation2 + $0x56] sm:$0x3]
    %v83 = vld [vmem:[#allocation2 + $0x58] sm:$0x3]
    %v84 = vld [vmem:[#allocation2 + $0x5a] sm:$0x3]
    %v85 = vld [vmem:[#allocation2 + $0x5c] sm:$0x3]
    %v86 = vld [vmem:[#allocation2 + $0x5e] sm:$0x3]
    %v87 = vld [vmem:[#allocation2 + $0x60] sm:$0x3]
    %v88 = vld [vmem:[#allocation2 + $0x62] sm:$0x3]
    %v89 = vld [vmem:[#allocation2 + $0x64] sm:$0x3]
    %v90 = vld [vmem:[#allocation2 + $0x66] sm:$0x3]
    %v91 = vld [vmem:[#allocation2 + $0x68] sm:$0x3]
    %v92 = vld [vmem:[#allocation2 + $0x6a] sm:$0x3]
    %v93 = vld [vmem:[#allocation2 + $0x6c] sm:$0x3]
    %v94 = vld [vmem:[#allocation2 + $0x6e] sm:$0x3]
    %v95 = vld [vmem:[#allocation2 + $0x70] sm:$0x3]
    %v96 = vld [vmem:[#allocation2 + $0x72] sm:$0x3]
    %v97 = vld [vmem:[#allocation2 + $0x74] sm:$0x3]
    %v98 = vld [vmem:[#allocation2 + $0x76] sm:$0x3]
    %v99 = vld [vmem:[#allocation2 + $0x78] sm:$0x3]
    %v100 = vld [vmem:[#allocation2 + $0x7a] sm:$0x3]
    %v101 = vld [vmem:[#allocation2 + $0x7c] sm:$0x3]
    %v102 = vld [vmem:[#allocation2 + $0x7e] sm:$0x3]
    %v103 = vld [vmem:[#allocation2 + $0x80] sm:$0x3]
    %v104 = vld [vmem:[#allocation2 + $0x82] sm:$0x3]
    %v105 = vld [vmem:[#allocation2 + $0x84] sm:$0x3]
    %v106 = vld [vmem:[#allocation2 + $0x86] sm:$0x3]
    %v107 = vld [vmem:[#allocation2 + $0x88] sm:$0x3]
    %v108 = vld [vmem:[#allocation2 + $0x8a] sm:$0x3]
    %v109 = vld [vmem:[#allocation2 + $0x8c] sm:$0x3]
    %v110 = vld [vmem:[#allocation2 + $0x8e] sm:$0x3]
    %v111 = vld [vmem:[#allocation2 + $0x90] sm:$0x3]
    %v112 = vld [vmem:[#allocation2 + $0x92] sm:$0x3]
    %v113 = vld [vmem:[#allocation2 + $0x94] sm:$0x3]
    %v114 = vld [vmem:[#allocation2 + $0x96] sm:$0x3]
    %v115 = vld [vmem:[#allocation2 + $0x98] sm:$0x3]
    %v116 = vld [vmem:[#allocation2 + $0x9a] sm:$0x3]
    %v117 = vld [vmem:[#allocation2 + $0x9c] sm:$0x3]
    %v118 = vld [vmem:[#allocation2 + $0x9e] sm:$0x3]
    %v119 = vunpack.c.l.bf16 %v39
    %v120 = vunpack.c.l.bf16 %v40
    %v121 = vunpack.c.l.bf16 %v41
    %v122 = vunpack.c.l.bf16 %v42
    %v123 = vunpack.c.l.bf16 %v43
    %v124 = vunpack.c.l.bf16 %v44
    %v125 = vunpack.c.l.bf16 %v45
    %v126 = vunpack.c.l.bf16 %v46
    %v127 = vunpack.c.l.bf16 %v47
    %v128 = vunpack.c.l.bf16 %v48
    %v129 = vunpack.c.l.bf16 %v49
    %v130 = vunpack.c.l.bf16 %v50
    %v131 = vunpack.c.l.bf16 %v51
    %v132 = vunpack.c.l.bf16 %v52
    %v133 = vunpack.c.l.bf16 %v53
    %v134 = vunpack.c.l.bf16 %v54
    %v135 = vunpack.c.l.bf16 %v55
    %v136 = vunpack.c.l.bf16 %v56
    %v137 = vunpack.c.l.bf16 %v57
    %v138 = vunpack.c.l.bf16 %v58
    %v139 = vunpack.c.l.bf16 %v59
    %v140 = vunpack.c.l.bf16 %v60
    %v141 = vunpack.c.l.bf16 %v61
    %v142 = vunpack.c.l.bf16 %v62
    %v143 = vunpack.c.l.bf16 %v63
    %v144 = vunpack.c.l.bf16 %v64
    %v145 = vunpack.c.l.bf16 %v65
    %v146 = vunpack.c.l.bf16 %v66
    %v147 = vunpack.c.l.bf16 %v67
    %v148 = vunpack.c.l.bf16 %v68
    %v149 = vunpack.c.l.bf16 %v69
    %v150 = vunpack.c.l.bf16 %v70
    %v151 = vunpack.c.l.bf16 %v71
    %v152 = vunpack.c.l.bf16 %v72
    %v153 = vunpack.c.l.bf16 %v73
    %v154 = vunpack.c.l.bf16 %v74
    %v155 = vunpack.c.l.bf16 %v75
    %v156 = vunpack.c.l.bf16 %v76
    %v157 = vunpack.c.l.bf16 %v77
    %v158 = vunpack.c.l.bf16 %v78
    %v159 = vunpack.c.l.bf16 %v79
    %v160 = vunpack.c.l.bf16 %v80
    %v161 = vunpack.c.l.bf16 %v81
    %v162 = vunpack.c.l.bf16 %v82
    %v163 = vunpack.c.l.bf16 %v83
    %v164 = vunpack.c.l.bf16 %v84
    %v165 = vunpack.c.l.bf16 %v85
    %v166 = vunpack.c.l.bf16 %v86
    %v167 = vunpack.c.l.bf16 %v87
    %v168 = vunpack.c.l.bf16 %v88
    %v169 = vunpack.c.l.bf16 %v89
    %v170 = vunpack.c.l.bf16 %v90
    %v171 = vunpack.c.l.bf16 %v91
    %v172 = vunpack.c.l.bf16 %v92
    %v173 = vunpack.c.l.bf16 %v93
    %v174 = vunpack.c.l.bf16 %v94
    %v175 = vunpack.c.l.bf16 %v95
    %v176 = vunpack.c.l.bf16 %v96
    %v177 = vunpack.c.l.bf16 %v97
    %v178 = vunpack.c.l.bf16 %v98
    %v179 = vunpack.c.l.bf16 %v99
    %v180 = vunpack.c.l.bf16 %v100
    %v181 = vunpack.c.l.bf16 %v101
    %v182 = vunpack.c.l.bf16 %v102
    %v183 = vunpack.c.l.bf16 %v103
    %v184 = vunpack.c.l.bf16 %v104
    %v185 = vunpack.c.l.bf16 %v105
    %v186 = vunpack.c.l.bf16 %v106
    %v187 = vunpack.c.l.bf16 %v107
    %v188 = vunpack.c.l.bf16 %v108
    %v189 = vunpack.c.l.bf16 %v109
    %v190 = vunpack.c.l.bf16 %v110
    %v191 = vunpack.c.l.bf16 %v111
    %v192 = vunpack.c.l.bf16 %v112
    %v193 = vunpack.c.l.bf16 %v113
    %v194 = vunpack.c.l.bf16 %v114
    %v195 = vunpack.c.l.bf16 %v115
    %v196 = vunpack.c.l.bf16 %v116
    %v197 = vunpack.c.l.bf16 %v117
    %v198 = vunpack.c.l.bf16 %v118
    %v199 = vperm.slane %v27, 0
    %v200 = vlaneseq
    %v201 = vshrl.u32 %v200, 7
    %203 = vset.pattern.permute.xlu0 %v201
    %204 = vperm.xlu0 %203, %v199
    %v205 = vpop.permute.xlu0 %204
    %v206 = vperm.slane %v27, 1
    %v207 = vlaneseq
    %v208 = vshrl.u32 %v207, 7
    %210 = vset.pattern.permute.xlu0 %v208
    %211 = vperm.xlu0 %210, %v206
    %v212 = vpop.permute.xlu0 %211
    %v213 = vperm.slane %v27, 2
    %v214 = vlaneseq
    %v215 = vshrl.u32 %v214, 7
    %217 = vset.pattern.permute.xlu0 %v215
    %218 = vperm.xlu0 %217, %v213
    %v219 = vpop.permute.xlu0 %218
    %v220 = vperm.slane %v27, 3
    %v221 = vlaneseq
    %v222 = vshrl.u32 %v221, 7
    %224 = vset.pattern.permute.xlu0 %v222
    %225 = vperm.xlu0 %224, %v220
    %v226 = vpop.permute.xlu0 %225
    %v227 = vperm.slane %v27, 4
    %v228 = vlaneseq
    %v229 = vshrl.u32 %v228, 7
    %231 = vset.pattern.permute.xlu0 %v229
    %232 = vperm.xlu0 %231, %v227
    %v233 = vpop.permute.xlu0 %232
    %v234 = vperm.slane %v27, 5
    %v235 = vlaneseq
    %v236 = vshrl.u32 %v235, 7
    %238 = vset.pattern.permute.xlu0 %v236
    %239 = vperm.xlu0 %238, %v234
    %v240 = vpop.permute.xlu0 %239
    %v241 = vperm.slane %v27, 6
    %v242 = vlaneseq
    %v243 = vshrl.u32 %v242, 7
    %245 = vset.pattern.permute.xlu0 %v243
    %246 = vperm.xlu0 %245, %v241
    %v247 = vpop.permute.xlu0 %246
    %v248 = vperm.slane %v27, 7
    %v249 = vlaneseq
    %v250 = vshrl.u32 %v249, 7
    %252 = vset.pattern.permute.xlu0 %v250
    %253 = vperm.xlu0 %252, %v248
    %v254 = vpop.permute.xlu0 %253
    %v255 = vperm.slane %v28, 0
    %v256 = vlaneseq
    %v257 = vshrl.u32 %v256, 7
    %259 = vset.pattern.permute.xlu0 %v257
    %260 = vperm.xlu0 %259, %v255
    %v261 = vpop.permute.xlu0 %260
    %v262 = vperm.slane %v28, 1
    %v263 = vlaneseq
    %v264 = vshrl.u32 %v263, 7
    %266 = vset.pattern.permute.xlu0 %v264
    %267 = vperm.xlu0 %266, %v262
    %v268 = vpop.permute.xlu0 %267
    %v269 = vperm.slane %v28, 2
    %v270 = vlaneseq
    %v271 = vshrl.u32 %v270, 7
    %273 = vset.pattern.permute.xlu0 %v271
    %274 = vperm.xlu0 %273, %v269
    %v275 = vpop.permute.xlu0 %274
    %v276 = vperm.slane %v28, 3
    %v277 = vlaneseq
    %v278 = vshrl.u32 %v277, 7
    %280 = vset.pattern.permute.xlu0 %v278
    %281 = vperm.xlu0 %280, %v276
    %v282 = vpop.permute.xlu0 %281
    %v283 = vperm.slane %v28, 4
    %v284 = vlaneseq
    %v285 = vshrl.u32 %v284, 7
    %287 = vset.pattern.permute.xlu0 %v285
    %288 = vperm.xlu0 %287, %v283
    %v289 = vpop.permute.xlu0 %288
    %v290 = vperm.slane %v28, 5
    %v291 = vlaneseq
    %v292 = vshrl.u32 %v291, 7
    %294 = vset.pattern.permute.xlu0 %v292
    %295 = vperm.xlu0 %294, %v290
    %v296 = vpop.permute.xlu0 %295
    %v297 = vperm.slane %v28, 6
    %v298 = vlaneseq
    %v299 = vshrl.u32 %v298, 7
    %301 = vset.pattern.permute.xlu0 %v299
    %302 = vperm.xlu0 %301, %v297
    %v303 = vpop.permute.xlu0 %302
    %v304 = vperm.slane %v28, 7
    %v305 = vlaneseq
    %v306 = vshrl.u32 %v305, 7
    %308 = vset.pattern.permute.xlu0 %v306
    %309 = vperm.xlu0 %308, %v304
    %v310 = vpop.permute.xlu0 %309
    %v311 = vperm.slane %v29, 0
    %v312 = vlaneseq
    %v313 = vshrl.u32 %v312, 7
    %315 = vset.pattern.permute.xlu0 %v313
    %316 = vperm.xlu0 %315, %v311
    %v317 = vpop.permute.xlu0 %316
    %v318 = vperm.slane %v29, 1
    %v319 = vlaneseq
    %v320 = vshrl.u32 %v319, 7
    %322 = vset.pattern.permute.xlu0 %v320
    %323 = vperm.xlu0 %322, %v318
    %v324 = vpop.permute.xlu0 %323
    %v325 = vperm.slane %v29, 2
    %v326 = vlaneseq
    %v327 = vshrl.u32 %v326, 7
    %329 = vset.pattern.permute.xlu0 %v327
    %330 = vperm.xlu0 %329, %v325
    %v331 = vpop.permute.xlu0 %330
    %v332 = vperm.slane %v29, 3
    %v333 = vlaneseq
    %v334 = vshrl.u32 %v333, 7
    %336 = vset.pattern.permute.xlu0 %v334
    %337 = vperm.xlu0 %336, %v332
    %v338 = vpop.permute.xlu0 %337
    %v339 = vperm.slane %v30, 0
    %v340 = vlaneseq
    %v341 = vshrl.u32 %v340, 7
    %343 = vset.pattern.permute.xlu0 %v341
    %344 = vperm.xlu0 %343, %v339
    %v345 = vpop.permute.xlu0 %344
    %v346 = vperm.slane %v30, 1
    %v347 = vlaneseq
    %v348 = vshrl.u32 %v347, 7
    %350 = vset.pattern.permute.xlu0 %v348
    %351 = vperm.xlu0 %350, %v346
    %v352 = vpop.permute.xlu0 %351
    %v353 = vperm.slane %v30, 2
    %v354 = vlaneseq
    %v355 = vshrl.u32 %v354, 7
    %357 = vset.pattern.permute.xlu0 %v355
    %358 = vperm.xlu0 %357, %v353
    %v359 = vpop.permute.xlu0 %358
    %v360 = vperm.slane %v30, 3
    %v361 = vlaneseq
    %v362 = vshrl.u32 %v361, 7
    %364 = vset.pattern.permute.xlu0 %v362
    %365 = vperm.xlu0 %364, %v360
    %v366 = vpop.permute.xlu0 %365
    %v367 = vperm.slane %v30, 4
    %v368 = vlaneseq
    %v369 = vshrl.u32 %v368, 7
    %371 = vset.pattern.permute.xlu0 %v369
    %372 = vperm.xlu0 %371, %v367
    %v373 = vpop.permute.xlu0 %372
    %v374 = vperm.slane %v30, 5
    %v375 = vlaneseq
    %v376 = vshrl.u32 %v375, 7
    %378 = vset.pattern.permute.xlu0 %v376
    %379 = vperm.xlu0 %378, %v374
    %v380 = vpop.permute.xlu0 %379
    %v381 = vperm.slane %v30, 6
    %v382 = vlaneseq
    %v383 = vshrl.u32 %v382, 7
    %385 = vset.pattern.permute.xlu0 %v383
    %386 = vperm.xlu0 %385, %v381
    %v387 = vpop.permute.xlu0 %386
    %v388 = vperm.slane %v30, 7
    %v389 = vlaneseq
    %v390 = vshrl.u32 %v389, 7
    %392 = vset.pattern.permute.xlu0 %v390
    %393 = vperm.xlu0 %392, %v388
    %v394 = vpop.permute.xlu0 %393
    %v395 = vperm.slane %v31, 0
    %v396 = vlaneseq
    %v397 = vshrl.u32 %v396, 7
    %399 = vset.pattern.permute.xlu0 %v397
    %400 = vperm.xlu0 %399, %v395
    %v401 = vpop.permute.xlu0 %400
    %v402 = vperm.slane %v31, 1
    %v403 = vlaneseq
    %v404 = vshrl.u32 %v403, 7
    %406 = vset.pattern.permute.xlu0 %v404
    %407 = vperm.xlu0 %406, %v402
    %v408 = vpop.permute.xlu0 %407
    %v409 = vperm.slane %v31, 2
    %v410 = vlaneseq
    %v411 = vshrl.u32 %v410, 7
    %413 = vset.pattern.permute.xlu0 %v411
    %414 = vperm.xlu0 %413, %v409
    %v415 = vpop.permute.xlu0 %414
    %v416 = vperm.slane %v31, 3
    %v417 = vlaneseq
    %v418 = vshrl.u32 %v417, 7
    %420 = vset.pattern.permute.xlu0 %v418
    %421 = vperm.xlu0 %420, %v416
    %v422 = vpop.permute.xlu0 %421
    %v423 = vperm.slane %v31, 4
    %v424 = vlaneseq
    %v425 = vshrl.u32 %v424, 7
    %427 = vset.pattern.permute.xlu0 %v425
    %428 = vperm.xlu0 %427, %v423
    %v429 = vpop.permute.xlu0 %428
    %v430 = vperm.slane %v31, 5
    %v431 = vlaneseq
    %v432 = vshrl.u32 %v431, 7
    %434 = vset.pattern.permute.xlu0 %v432
    %435 = vperm.xlu0 %434, %v430
    %v436 = vpop.permute.xlu0 %435
    %v437 = vperm.slane %v31, 6
    %v438 = vlaneseq
    %v439 = vshrl.u32 %v438, 7
    %441 = vset.pattern.permute.xlu0 %v439
    %442 = vperm.xlu0 %441, %v437
    %v443 = vpop.permute.xlu0 %442
    %v444 = vperm.slane %v31, 7
    %v445 = vlaneseq
    %v446 = vshrl.u32 %v445, 7
    %448 = vset.pattern.permute.xlu0 %v446
    %449 = vperm.xlu0 %448, %v444
    %v450 = vpop.permute.xlu0 %449
    %v451 = vperm.slane %v32, 0
    %v452 = vlaneseq
    %v453 = vshrl.u32 %v452, 7
    %455 = vset.pattern.permute.xlu0 %v453
    %456 = vperm.xlu0 %455, %v451
    %v457 = vpop.permute.xlu0 %456
    %v458 = vperm.slane %v32, 1
    %v459 = vlaneseq
    %v460 = vshrl.u32 %v459, 7
    %462 = vset.pattern.permute.xlu0 %v460
    %463 = vperm.xlu0 %462, %v458
    %v464 = vpop.permute.xlu0 %463
    %v465 = vperm.slane %v32, 2
    %v466 = vlaneseq
    %v467 = vshrl.u32 %v466, 7
    %469 = vset.pattern.permute.xlu0 %v467
    %470 = vperm.xlu0 %469, %v465
    %v471 = vpop.permute.xlu0 %470
    %v472 = vperm.slane %v32, 3
    %v473 = vlaneseq
    %v474 = vshrl.u32 %v473, 7
    %476 = vset.pattern.permute.xlu0 %v474
    %477 = vperm.xlu0 %476, %v472
    %v478 = vpop.permute.xlu0 %477
    %v479 = vperm.slane %v33, 0
    %v480 = vlaneseq
    %v481 = vshrl.u32 %v480, 7
    %483 = vset.pattern.permute.xlu0 %v481
    %484 = vperm.xlu0 %483, %v479
    %v485 = vpop.permute.xlu0 %484
    %v486 = vperm.slane %v33, 1
    %v487 = vlaneseq
    %v488 = vshrl.u32 %v487, 7
    %490 = vset.pattern.permute.xlu0 %v488
    %491 = vperm.xlu0 %490, %v486
    %v492 = vpop.permute.xlu0 %491
    %v493 = vperm.slane %v33, 2
    %v494 = vlaneseq
    %v495 = vshrl.u32 %v494, 7
    %497 = vset.pattern.permute.xlu0 %v495
    %498 = vperm.xlu0 %497, %v493
    %v499 = vpop.permute.xlu0 %498
    %v500 = vperm.slane %v33, 3
    %v501 = vlaneseq
    %v502 = vshrl.u32 %v501, 7
    %504 = vset.pattern.permute.xlu0 %v502
    %505 = vperm.xlu0 %504, %v500
    %v506 = vpop.permute.xlu0 %505
    %v507 = vperm.slane %v33, 4
    %v508 = vlaneseq
    %v509 = vshrl.u32 %v508, 7
    %511 = vset.pattern.permute.xlu0 %v509
    %512 = vperm.xlu0 %511, %v507
    %v513 = vpop.permute.xlu0 %512
    %v514 = vperm.slane %v33, 5
    %v515 = vlaneseq
    %v516 = vshrl.u32 %v515, 7
    %518 = vset.pattern.permute.xlu0 %v516
    %519 = vperm.xlu0 %518, %v514
    %v520 = vpop.permute.xlu0 %519
    %v521 = vperm.slane %v33, 6
    %v522 = vlaneseq
    %v523 = vshrl.u32 %v522, 7
    %525 = vset.pattern.permute.xlu0 %v523
    %526 = vperm.xlu0 %525, %v521
    %v527 = vpop.permute.xlu0 %526
    %v528 = vperm.slane %v33, 7
    %v529 = vlaneseq
    %v530 = vshrl.u32 %v529, 7
    %532 = vset.pattern.permute.xlu0 %v530
    %533 = vperm.xlu0 %532, %v528
    %v534 = vpop.permute.xlu0 %533
    %v535 = vperm.slane %v34, 0
    %v536 = vlaneseq
    %v537 = vshrl.u32 %v536, 7
    %539 = vset.pattern.permute.xlu0 %v537
    %540 = vperm.xlu0 %539, %v535
    %v541 = vpop.permute.xlu0 %540
    %v542 = vperm.slane %v34, 1
    %v543 = vlaneseq
    %v544 = vshrl.u32 %v543, 7
    %546 = vset.pattern.permute.xlu0 %v544
    %547 = vperm.xlu0 %546, %v542
    %v548 = vpop.permute.xlu0 %547
    %v549 = vperm.slane %v34, 2
    %v550 = vlaneseq
    %v551 = vshrl.u32 %v550, 7
    %553 = vset.pattern.permute.xlu0 %v551
    %554 = vperm.xlu0 %553, %v549
    %v555 = vpop.permute.xlu0 %554
    %v556 = vperm.slane %v34, 3
    %v557 = vlaneseq
    %v558 = vshrl.u32 %v557, 7
    %560 = vset.pattern.permute.xlu0 %v558
    %561 = vperm.xlu0 %560, %v556
    %v562 = vpop.permute.xlu0 %561
    %v563 = vperm.slane %v34, 4
    %v564 = vlaneseq
    %v565 = vshrl.u32 %v564, 7
    %567 = vset.pattern.permute.xlu0 %v565
    %568 = vperm.xlu0 %567, %v563
    %v569 = vpop.permute.xlu0 %568
    %v570 = vperm.slane %v34, 5
    %v571 = vlaneseq
    %v572 = vshrl.u32 %v571, 7
    %574 = vset.pattern.permute.xlu0 %v572
    %575 = vperm.xlu0 %574, %v570
    %v576 = vpop.permute.xlu0 %575
    %v577 = vperm.slane %v34, 6
    %v578 = vlaneseq
    %v579 = vshrl.u32 %v578, 7
    %581 = vset.pattern.permute.xlu0 %v579
    %582 = vperm.xlu0 %581, %v577
    %v583 = vpop.permute.xlu0 %582
    %v584 = vperm.slane %v34, 7
    %v585 = vlaneseq
    %v586 = vshrl.u32 %v585, 7
    %588 = vset.pattern.permute.xlu0 %v586
    %589 = vperm.xlu0 %588, %v584
    %v590 = vpop.permute.xlu0 %589
    %v591 = vperm.slane %v35, 0
    %v592 = vlaneseq
    %v593 = vshrl.u32 %v592, 7
    %595 = vset.pattern.permute.xlu0 %v593
    %596 = vperm.xlu0 %595, %v591
    %v597 = vpop.permute.xlu0 %596
    %v598 = vperm.slane %v35, 1
    %v599 = vlaneseq
    %v600 = vshrl.u32 %v599, 7
    %602 = vset.pattern.permute.xlu0 %v600
    %603 = vperm.xlu0 %602, %v598
    %v604 = vpop.permute.xlu0 %603
    %v605 = vperm.slane %v35, 2
    %v606 = vlaneseq
    %v607 = vshrl.u32 %v606, 7
    %609 = vset.pattern.permute.xlu0 %v607
    %610 = vperm.xlu0 %609, %v605
    %v611 = vpop.permute.xlu0 %610
    %v612 = vperm.slane %v35, 3
    %v613 = vlaneseq
    %v614 = vshrl.u32 %v613, 7
    %616 = vset.pattern.permute.xlu0 %v614
    %617 = vperm.xlu0 %616, %v612
    %v618 = vpop.permute.xlu0 %617
    %v619 = vperm.slane %v36, 0
    %v620 = vlaneseq
    %v621 = vshrl.u32 %v620, 7
    %623 = vset.pattern.permute.xlu0 %v621
    %624 = vperm.xlu0 %623, %v619
    %v625 = vpop.permute.xlu0 %624
    %v626 = vperm.slane %v36, 1
    %v627 = vlaneseq
    %v628 = vshrl.u32 %v627, 7
    %630 = vset.pattern.permute.xlu0 %v628
    %631 = vperm.xlu0 %630, %v626
    %v632 = vpop.permute.xlu0 %631
    %v633 = vperm.slane %v36, 2
    %v634 = vlaneseq
    %v635 = vshrl.u32 %v634, 7
    %637 = vset.pattern.permute.xlu0 %v635
    %638 = vperm.xlu0 %637, %v633
    %v639 = vpop.permute.xlu0 %638
    %v640 = vperm.slane %v36, 3
    %v641 = vlaneseq
    %v642 = vshrl.u32 %v641, 7
    %644 = vset.pattern.permute.xlu0 %v642
    %645 = vperm.xlu0 %644, %v640
    %v646 = vpop.permute.xlu0 %645
    %v647 = vperm.slane %v36, 4
    %v648 = vlaneseq
    %v649 = vshrl.u32 %v648, 7
    %651 = vset.pattern.permute.xlu0 %v649
    %652 = vperm.xlu0 %651, %v647
    %v653 = vpop.permute.xlu0 %652
    %v654 = vperm.slane %v36, 5
    %v655 = vlaneseq
    %v656 = vshrl.u32 %v655, 7
    %658 = vset.pattern.permute.xlu0 %v656
    %659 = vperm.xlu0 %658, %v654
    %v660 = vpop.permute.xlu0 %659
    %v661 = vperm.slane %v36, 6
    %v662 = vlaneseq
    %v663 = vshrl.u32 %v662, 7
    %665 = vset.pattern.permute.xlu0 %v663
    %666 = vperm.xlu0 %665, %v661
    %v667 = vpop.permute.xlu0 %666
    %v668 = vperm.slane %v36, 7
    %v669 = vlaneseq
    %v670 = vshrl.u32 %v669, 7
    %672 = vset.pattern.permute.xlu0 %v670
    %673 = vperm.xlu0 %672, %v668
    %v674 = vpop.permute.xlu0 %673
    %v675 = vperm.slane %v37, 0
    %v676 = vlaneseq
    %v677 = vshrl.u32 %v676, 7
    %679 = vset.pattern.permute.xlu0 %v677
    %680 = vperm.xlu0 %679, %v675
    %v681 = vpop.permute.xlu0 %680
    %v682 = vperm.slane %v37, 1
    %v683 = vlaneseq
    %v684 = vshrl.u32 %v683, 7
    %686 = vset.pattern.permute.xlu0 %v684
    %687 = vperm.xlu0 %686, %v682
    %v688 = vpop.permute.xlu0 %687
    %v689 = vperm.slane %v37, 2
    %v690 = vlaneseq
    %v691 = vshrl.u32 %v690, 7
    %693 = vset.pattern.permute.xlu0 %v691
    %694 = vperm.xlu0 %693, %v689
    %v695 = vpop.permute.xlu0 %694
    %v696 = vperm.slane %v37, 3
    %v697 = vlaneseq
    %v698 = vshrl.u32 %v697, 7
    %700 = vset.pattern.permute.xlu0 %v698
    %701 = vperm.xlu0 %700, %v696
    %v702 = vpop.permute.xlu0 %701
    %v703 = vperm.slane %v37, 4
    %v704 = vlaneseq
    %v705 = vshrl.u32 %v704, 7
    %707 = vset.pattern.permute.xlu0 %v705
    %708 = vperm.xlu0 %707, %v703
    %v709 = vpop.permute.xlu0 %708
    %v710 = vperm.slane %v37, 5
    %v711 = vlaneseq
    %v712 = vshrl.u32 %v711, 7
    %714 = vset.pattern.permute.xlu0 %v712
    %715 = vperm.xlu0 %714, %v710
    %v716 = vpop.permute.xlu0 %715
    %v717 = vperm.slane %v37, 6
    %v718 = vlaneseq
    %v719 = vshrl.u32 %v718, 7
    %721 = vset.pattern.permute.xlu0 %v719
    %722 = vperm.xlu0 %721, %v717
    %v723 = vpop.permute.xlu0 %722
    %v724 = vperm.slane %v37, 7
    %v725 = vlaneseq
    %v726 = vshrl.u32 %v725, 7
    %728 = vset.pattern.permute.xlu0 %v726
    %729 = vperm.xlu0 %728, %v724
    %v730 = vpop.permute.xlu0 %729
    %v731 = vperm.slane %v38, 0
    %v732 = vlaneseq
    %v733 = vshrl.u32 %v732, 7
    %735 = vset.pattern.permute.xlu0 %v733
    %736 = vperm.xlu0 %735, %v731
    %v737 = vpop.permute.xlu0 %736
    %v738 = vperm.slane %v38, 1
    %v739 = vlaneseq
    %v740 = vshrl.u32 %v739, 7
    %742 = vset.pattern.permute.xlu0 %v740
    %743 = vperm.xlu0 %742, %v738
    %v744 = vpop.permute.xlu0 %743
    %v745 = vperm.slane %v38, 2
    %v746 = vlaneseq
    %v747 = vshrl.u32 %v746, 7
    %749 = vset.pattern.permute.xlu0 %v747
    %750 = vperm.xlu0 %749, %v745
    %v751 = vpop.permute.xlu0 %750
    %v752 = vperm.slane %v38, 3
    %v753 = vlaneseq
    %v754 = vshrl.u32 %v753, 7
    %756 = vset.pattern.permute.xlu0 %v754
    %757 = vperm.xlu0 %756, %v752
    %v758 = vpop.permute.xlu0 %757
    %v759 = vmul.f32 %v119, %v205
    %v760 = vmul.f32 %v120, %v212
    %v761 = vmul.f32 %v121, %v219
    %v762 = vmul.f32 %v122, %v226
    %v763 = vmul.f32 %v123, %v233
    %v764 = vmul.f32 %v124, %v240
    %v765 = vmul.f32 %v125, %v247
    %v766 = vmul.f32 %v126, %v254
    %v767 = vmul.f32 %v127, %v261
    %v768 = vmul.f32 %v128, %v268
    %v769 = vmul.f32 %v129, %v275
    %v770 = vmul.f32 %v130, %v282
    %v771 = vmul.f32 %v131, %v289
    %v772 = vmul.f32 %v132, %v296
    %v773 = vmul.f32 %v133, %v303
    %v774 = vmul.f32 %v134, %v310
    %v775 = vmul.f32 %v135, %v317
    %v776 = vmul.f32 %v136, %v324
    %v777 = vmul.f32 %v137, %v331
    %v778 = vmul.f32 %v138, %v338
    %v779 = vmul.f32 %v139, %v345
    %v780 = vmul.f32 %v140, %v352
    %v781 = vmul.f32 %v141, %v359
    %v782 = vmul.f32 %v142, %v366
    %v783 = vmul.f32 %v143, %v373
    %v784 = vmul.f32 %v144, %v380
    %v785 = vmul.f32 %v145, %v387
    %v786 = vmul.f32 %v146, %v394
    %v787 = vmul.f32 %v147, %v401
    %v788 = vmul.f32 %v148, %v408
    %v789 = vmul.f32 %v149, %v415
    %v790 = vmul.f32 %v150, %v422
    %v791 = vmul.f32 %v151, %v429
    %v792 = vmul.f32 %v152, %v436
    %v793 = vmul.f32 %v153, %v443
    %v794 = vmul.f32 %v154, %v450
    %v795 = vmul.f32 %v155, %v457
    %v796 = vmul.f32 %v156, %v464
    %v797 = vmul.f32 %v157, %v471
    %v798 = vmul.f32 %v158, %v478
    %v799 = vmul.f32 %v159, %v485
    %v800 = vmul.f32 %v160, %v492
    %v801 = vmul.f32 %v161, %v499
    %v802 = vmul.f32 %v162, %v506
    %v803 = vmul.f32 %v163, %v513
    %v804 = vmul.f32 %v164, %v520
    %v805 = vmul.f32 %v165, %v527
    %v806 = vmul.f32 %v166, %v534
    %v807 = vmul.f32 %v167, %v541
    %v808 = vmul.f32 %v168, %v548
    %v809 = vmul.f32 %v169, %v555
    %v810 = vmul.f32 %v170, %v562
    %v811 = vmul.f32 %v171, %v569
    %v812 = vmul.f32 %v172, %v576
    %v813 = vmul.f32 %v173, %v583
    %v814 = vmul.f32 %v174, %v590
    %v815 = vmul.f32 %v175, %v597
    %v816 = vmul.f32 %v176, %v604
    %v817 = vmul.f32 %v177, %v611
    %v818 = vmul.f32 %v178, %v618
    %v819 = vmul.f32 %v179, %v625
    %v820 = vmul.f32 %v180, %v632
    %v821 = vmul.f32 %v181, %v639
    %v822 = vmul.f32 %v182, %v646
    %v823 = vmul.f32 %v183, %v653
    %v824 = vmul.f32 %v184, %v660
    %v825 = vmul.f32 %v185, %v667
    %v826 = vmul.f32 %v186, %v674
    %v827 = vmul.f32 %v187, %v681
    %v828 = vmul.f32 %v188, %v688
    %v829 = vmul.f32 %v189, %v695
    %v830 = vmul.f32 %v190, %v702
    %v831 = vmul.f32 %v191, %v709
    %v832 = vmul.f32 %v192, %v716
    %v833 = vmul.f32 %v193, %v723
    %v834 = vmul.f32 %v194, %v730
    %v835 = vmul.f32 %v195, %v737
    %v836 = vmul.f32 %v196, %v744
    %v837 = vmul.f32 %v197, %v751
    %v838 = vmul.f32 %v198, %v758
    %vm839 = vcmask 257024
    %v840 = vsel %vm839, %v759, 0.0
    %v841 = vrot.slane %v840, 4
    %v842 = vadd.f32 %v840, %v841
    %v843 = vrot.slane %v842, 2
    %v844 = vadd.f32 %v842, %v843
    %v845 = vrot.slane %v844, 1
    %v846 = vadd.f32 %v844, %v845
    %v847 = vsel %vm839, %v760, 0.0
    %v848 = vrot.slane %v847, 4
    %v849 = vadd.f32 %v847, %v848
    %v850 = vrot.slane %v849, 2
    %v851 = vadd.f32 %v849, %v850
    %v852 = vrot.slane %v851, 1
    %v853 = vadd.f32 %v851, %v852
    %v854 = vsel %vm839, %v761, 0.0
    %v855 = vrot.slane %v854, 4
    %v856 = vadd.f32 %v854, %v855
    %v857 = vrot.slane %v856, 2
    %v858 = vadd.f32 %v856, %v857
    %v859 = vrot.slane %v858, 1
    %v860 = vadd.f32 %v858, %v859
    %v861 = vsel %vm839, %v762, 0.0
    %v862 = vrot.slane %v861, 4
    %v863 = vadd.f32 %v861, %v862
    %v864 = vrot.slane %v863, 2
    %v865 = vadd.f32 %v863, %v864
    %v866 = vrot.slane %v865, 1
    %v867 = vadd.f32 %v865, %v866
    %v868 = vsel %vm839, %v763, 0.0
    %v869 = vrot.slane %v868, 4
    %v870 = vadd.f32 %v868, %v869
    %v871 = vrot.slane %v870, 2
    %v872 = vadd.f32 %v870, %v871
    %v873 = vrot.slane %v872, 1
    %v874 = vadd.f32 %v872, %v873
    %v875 = vsel %vm839, %v764, 0.0
    %v876 = vrot.slane %v875, 4
    %v877 = vadd.f32 %v875, %v876
    %v878 = vrot.slane %v877, 2
    %v879 = vadd.f32 %v877, %v878
    %v880 = vrot.slane %v879, 1
    %v881 = vadd.f32 %v879, %v880
    %v882 = vsel %vm839, %v765, 0.0
    %v883 = vrot.slane %v882, 4
    %v884 = vadd.f32 %v882, %v883
    %v885 = vrot.slane %v884, 2
    %v886 = vadd.f32 %v884, %v885
    %v887 = vrot.slane %v886, 1
    %v888 = vadd.f32 %v886, %v887
    %v889 = vsel %vm839, %v766, 0.0
    %v890 = vrot.slane %v889, 4
    %v891 = vadd.f32 %v889, %v890
    %v892 = vrot.slane %v891, 2
    %v893 = vadd.f32 %v891, %v892
    %v894 = vrot.slane %v893, 1
    %v895 = vadd.f32 %v893, %v894
    %v896 = vsel %vm839, %v767, 0.0
    %v897 = vrot.slane %v896, 4
    %v898 = vadd.f32 %v896, %v897
    %v899 = vrot.slane %v898, 2
    %v900 = vadd.f32 %v898, %v899
    %v901 = vrot.slane %v900, 1
    %v902 = vadd.f32 %v900, %v901
    %v903 = vsel %vm839, %v768, 0.0
    %v904 = vrot.slane %v903, 4
    %v905 = vadd.f32 %v903, %v904
    %v906 = vrot.slane %v905, 2
    %v907 = vadd.f32 %v905, %v906
    %v908 = vrot.slane %v907, 1
    %v909 = vadd.f32 %v907, %v908
    %v910 = vsel %vm839, %v769, 0.0
    %v911 = vrot.slane %v910, 4
    %v912 = vadd.f32 %v910, %v911
    %v913 = vrot.slane %v912, 2
    %v914 = vadd.f32 %v912, %v913
    %v915 = vrot.slane %v914, 1
    %v916 = vadd.f32 %v914, %v915
    %v917 = vsel %vm839, %v770, 0.0
    %v918 = vrot.slane %v917, 4
    %v919 = vadd.f32 %v917, %v918
    %v920 = vrot.slane %v919, 2
    %v921 = vadd.f32 %v919, %v920
    %v922 = vrot.slane %v921, 1
    %v923 = vadd.f32 %v921, %v922
    %v924 = vsel %vm839, %v771, 0.0
    %v925 = vrot.slane %v924, 4
    %v926 = vadd.f32 %v924, %v925
    %v927 = vrot.slane %v926, 2
    %v928 = vadd.f32 %v926, %v927
    %v929 = vrot.slane %v928, 1
    %v930 = vadd.f32 %v928, %v929
    %v931 = vsel %vm839, %v772, 0.0
    %v932 = vrot.slane %v931, 4
    %v933 = vadd.f32 %v931, %v932
    %v934 = vrot.slane %v933, 2
    %v935 = vadd.f32 %v933, %v934
    %v936 = vrot.slane %v935, 1
    %v937 = vadd.f32 %v935, %v936
    %v938 = vsel %vm839, %v773, 0.0
    %v939 = vrot.slane %v938, 4
    %v940 = vadd.f32 %v938, %v939
    %v941 = vrot.slane %v940, 2
    %v942 = vadd.f32 %v940, %v941
    %v943 = vrot.slane %v942, 1
    %v944 = vadd.f32 %v942, %v943
    %v945 = vsel %vm839, %v774, 0.0
    %v946 = vrot.slane %v945, 4
    %v947 = vadd.f32 %v945, %v946
    %v948 = vrot.slane %v947, 2
    %v949 = vadd.f32 %v947, %v948
    %v950 = vrot.slane %v949, 1
    %v951 = vadd.f32 %v949, %v950
    %v952 = vsel %vm839, %v775, 0.0
    %v953 = vrot.slane %v952, 4
    %v954 = vadd.f32 %v952, %v953
    %v955 = vrot.slane %v954, 2
    %v956 = vadd.f32 %v954, %v955
    %v957 = vrot.slane %v956, 1
    %v958 = vadd.f32 %v956, %v957
    %v959 = vsel %vm839, %v776, 0.0
    %v960 = vrot.slane %v959, 4
    %v961 = vadd.f32 %v959, %v960
    %v962 = vrot.slane %v961, 2
    %v963 = vadd.f32 %v961, %v962
    %v964 = vrot.slane %v963, 1
    %v965 = vadd.f32 %v963, %v964
    %v966 = vsel %vm839, %v777, 0.0
    %v967 = vrot.slane %v966, 4
    %v968 = vadd.f32 %v966, %v967
    %v969 = vrot.slane %v968, 2
    %v970 = vadd.f32 %v968, %v969
    %v971 = vrot.slane %v970, 1
    %v972 = vadd.f32 %v970, %v971
    %v973 = vsel %vm839, %v778, 0.0
    %v974 = vrot.slane %v973, 4
    %v975 = vadd.f32 %v973, %v974
    %v976 = vrot.slane %v975, 2
    %v977 = vadd.f32 %v975, %v976
    %v978 = vrot.slane %v977, 1
    %v979 = vadd.f32 %v977, %v978
    %v980 = vsel %vm839, %v779, 0.0
    %v981 = vrot.slane %v980, 4
    %v982 = vadd.f32 %v980, %v981
    %v983 = vrot.slane %v982, 2
    %v984 = vadd.f32 %v982, %v983
    %v985 = vrot.slane %v984, 1
    %v986 = vadd.f32 %v984, %v985
    %v987 = vsel %vm839, %v780, 0.0
    %v988 = vrot.slane %v987, 4
    %v989 = vadd.f32 %v987, %v988
    %v990 = vrot.slane %v989, 2
    %v991 = vadd.f32 %v989, %v990
    %v992 = vrot.slane %v991, 1
    %v993 = vadd.f32 %v991, %v992
    %v994 = vsel %vm839, %v781, 0.0
    %v995 = vrot.slane %v994, 4
    %v996 = vadd.f32 %v994, %v995
    %v997 = vrot.slane %v996, 2
    %v998 = vadd.f32 %v996, %v997
    %v999 = vrot.slane %v998, 1
    %v1000 = vadd.f32 %v998, %v999
    %v1001 = vsel %vm839, %v782, 0.0
    %v1002 = vrot.slane %v1001, 4
    %v1003 = vadd.f32 %v1001, %v1002
    %v1004 = vrot.slane %v1003, 2
    %v1005 = vadd.f32 %v1003, %v1004
    %v1006 = vrot.slane %v1005, 1
    %v1007 = vadd.f32 %v1005, %v1006
    %v1008 = vsel %vm839, %v783, 0.0
    %v1009 = vrot.slane %v1008, 4
    %v1010 = vadd.f32 %v1008, %v1009
    %v1011 = vrot.slane %v1010, 2
    %v1012 = vadd.f32 %v1010, %v1011
    %v1013 = vrot.slane %v1012, 1
    %v1014 = vadd.f32 %v1012, %v1013
    %v1015 = vsel %vm839, %v784, 0.0
    %v1016 = vrot.slane %v1015, 4
    %v1017 = vadd.f32 %v1015, %v1016
    %v1018 = vrot.slane %v1017, 2
    %v1019 = vadd.f32 %v1017, %v1018
    %v1020 = vrot.slane %v1019, 1
    %v1021 = vadd.f32 %v1019, %v1020
    %v1022 = vsel %vm839, %v785, 0.0
    %v1023 = vrot.slane %v1022, 4
    %v1024 = vadd.f32 %v1022, %v1023
    %v1025 = vrot.slane %v1024, 2
    %v1026 = vadd.f32 %v1024, %v1025
    %v1027 = vrot.slane %v1026, 1
    %v1028 = vadd.f32 %v1026, %v1027
    %v1029 = vsel %vm839, %v786, 0.0
    %v1030 = vrot.slane %v1029, 4
    %v1031 = vadd.f32 %v1029, %v1030
    %v1032 = vrot.slane %v1031, 2
    %v1033 = vadd.f32 %v1031, %v1032
    %v1034 = vrot.slane %v1033, 1
    %v1035 = vadd.f32 %v1033, %v1034
    %v1036 = vsel %vm839, %v787, 0.0
    %v1037 = vrot.slane %v1036, 4
    %v1038 = vadd.f32 %v1036, %v1037
    %v1039 = vrot.slane %v1038, 2
    %v1040 = vadd.f32 %v1038, %v1039
    %v1041 = vrot.slane %v1040, 1
    %v1042 = vadd.f32 %v1040, %v1041
    %v1043 = vsel %vm839, %v788, 0.0
    %v1044 = vrot.slane %v1043, 4
    %v1045 = vadd.f32 %v1043, %v1044
    %v1046 = vrot.slane %v1045, 2
    %v1047 = vadd.f32 %v1045, %v1046
    %v1048 = vrot.slane %v1047, 1
    %v1049 = vadd.f32 %v1047, %v1048
    %v1050 = vsel %vm839, %v789, 0.0
    %v1051 = vrot.slane %v1050, 4
    %v1052 = vadd.f32 %v1050, %v1051
    %v1053 = vrot.slane %v1052, 2
    %v1054 = vadd.f32 %v1052, %v1053
    %v1055 = vrot.slane %v1054, 1
    %v1056 = vadd.f32 %v1054, %v1055
    %v1057 = vsel %vm839, %v790, 0.0
    %v1058 = vrot.slane %v1057, 4
    %v1059 = vadd.f32 %v1057, %v1058
    %v1060 = vrot.slane %v1059, 2
    %v1061 = vadd.f32 %v1059, %v1060
    %v1062 = vrot.slane %v1061, 1
    %v1063 = vadd.f32 %v1061, %v1062
    %v1064 = vsel %vm839, %v791, 0.0
    %v1065 = vrot.slane %v1064, 4
    %v1066 = vadd.f32 %v1064, %v1065
    %v1067 = vrot.slane %v1066, 2
    %v1068 = vadd.f32 %v1066, %v1067
    %v1069 = vrot.slane %v1068, 1
    %v1070 = vadd.f32 %v1068, %v1069
    %v1071 = vsel %vm839, %v792, 0.0
    %v1072 = vrot.slane %v1071, 4
    %v1073 = vadd.f32 %v1071, %v1072
    %v1074 = vrot.slane %v1073, 2
    %v1075 = vadd.f32 %v1073, %v1074
    %v1076 = vrot.slane %v1075, 1
    %v1077 = vadd.f32 %v1075, %v1076
    %v1078 = vsel %vm839, %v793, 0.0
    %v1079 = vrot.slane %v1078, 4
    %v1080 = vadd.f32 %v1078, %v1079
    %v1081 = vrot.slane %v1080, 2
    %v1082 = vadd.f32 %v1080, %v1081
    %v1083 = vrot.slane %v1082, 1
    %v1084 = vadd.f32 %v1082, %v1083
    %v1085 = vsel %vm839, %v794, 0.0
    %v1086 = vrot.slane %v1085, 4
    %v1087 = vadd.f32 %v1085, %v1086
    %v1088 = vrot.slane %v1087, 2
    %v1089 = vadd.f32 %v1087, %v1088
    %v1090 = vrot.slane %v1089, 1
    %v1091 = vadd.f32 %v1089, %v1090
    %v1092 = vsel %vm839, %v795, 0.0
    %v1093 = vrot.slane %v1092, 4
    %v1094 = vadd.f32 %v1092, %v1093
    %v1095 = vrot.slane %v1094, 2
    %v1096 = vadd.f32 %v1094, %v1095
    %v1097 = vrot.slane %v1096, 1
    %v1098 = vadd.f32 %v1096, %v1097
    %v1099 = vsel %vm839, %v796, 0.0
    %v1100 = vrot.slane %v1099, 4
    %v1101 = vadd.f32 %v1099, %v1100
    %v1102 = vrot.slane %v1101, 2
    %v1103 = vadd.f32 %v1101, %v1102
    %v1104 = vrot.slane %v1103, 1
    %v1105 = vadd.f32 %v1103, %v1104
    %v1106 = vsel %vm839, %v797, 0.0
    %v1107 = vrot.slane %v1106, 4
    %v1108 = vadd.f32 %v1106, %v1107
    %v1109 = vrot.slane %v1108, 2
    %v1110 = vadd.f32 %v1108, %v1109
    %v1111 = vrot.slane %v1110, 1
    %v1112 = vadd.f32 %v1110, %v1111
    %v1113 = vsel %vm839, %v798, 0.0
    %v1114 = vrot.slane %v1113, 4
    %v1115 = vadd.f32 %v1113, %v1114
    %v1116 = vrot.slane %v1115, 2
    %v1117 = vadd.f32 %v1115, %v1116
    %v1118 = vrot.slane %v1117, 1
    %v1119 = vadd.f32 %v1117, %v1118
    %v1120 = vsel %vm839, %v799, 0.0
    %v1121 = vrot.slane %v1120, 4
    %v1122 = vadd.f32 %v1120, %v1121
    %v1123 = vrot.slane %v1122, 2
    %v1124 = vadd.f32 %v1122, %v1123
    %v1125 = vrot.slane %v1124, 1
    %v1126 = vadd.f32 %v1124, %v1125
    %v1127 = vsel %vm839, %v800, 0.0
    %v1128 = vrot.slane %v1127, 4
    %v1129 = vadd.f32 %v1127, %v1128
    %v1130 = vrot.slane %v1129, 2
    %v1131 = vadd.f32 %v1129, %v1130
    %v1132 = vrot.slane %v1131, 1
    %v1133 = vadd.f32 %v1131, %v1132
    %v1134 = vsel %vm839, %v801, 0.0
    %v1135 = vrot.slane %v1134, 4
    %v1136 = vadd.f32 %v1134, %v1135
    %v1137 = vrot.slane %v1136, 2
    %v1138 = vadd.f32 %v1136, %v1137
    %v1139 = vrot.slane %v1138, 1
    %v1140 = vadd.f32 %v1138, %v1139
    %v1141 = vsel %vm839, %v802, 0.0
    %v1142 = vrot.slane %v1141, 4
    %v1143 = vadd.f32 %v1141, %v1142
    %v1144 = vrot.slane %v1143, 2
    %v1145 = vadd.f32 %v1143, %v1144
    %v1146 = vrot.slane %v1145, 1
    %v1147 = vadd.f32 %v1145, %v1146
    %v1148 = vsel %vm839, %v803, 0.0
    %v1149 = vrot.slane %v1148, 4
    %v1150 = vadd.f32 %v1148, %v1149
    %v1151 = vrot.slane %v1150, 2
    %v1152 = vadd.f32 %v1150, %v1151
    %v1153 = vrot.slane %v1152, 1
    %v1154 = vadd.f32 %v1152, %v1153
    %v1155 = vsel %vm839, %v804, 0.0
    %v1156 = vrot.slane %v1155, 4
    %v1157 = vadd.f32 %v1155, %v1156
    %v1158 = vrot.slane %v1157, 2
    %v1159 = vadd.f32 %v1157, %v1158
    %v1160 = vrot.slane %v1159, 1
    %v1161 = vadd.f32 %v1159, %v1160
    %v1162 = vsel %vm839, %v805, 0.0
    %v1163 = vrot.slane %v1162, 4
    %v1164 = vadd.f32 %v1162, %v1163
    %v1165 = vrot.slane %v1164, 2
    %v1166 = vadd.f32 %v1164, %v1165
    %v1167 = vrot.slane %v1166, 1
    %v1168 = vadd.f32 %v1166, %v1167
    %v1169 = vsel %vm839, %v806, 0.0
    %v1170 = vrot.slane %v1169, 4
    %v1171 = vadd.f32 %v1169, %v1170
    %v1172 = vrot.slane %v1171, 2
    %v1173 = vadd.f32 %v1171, %v1172
    %v1174 = vrot.slane %v1173, 1
    %v1175 = vadd.f32 %v1173, %v1174
    %v1176 = vsel %vm839, %v807, 0.0
    %v1177 = vrot.slane %v1176, 4
    %v1178 = vadd.f32 %v1176, %v1177
    %v1179 = vrot.slane %v1178, 2
    %v1180 = vadd.f32 %v1178, %v1179
    %v1181 = vrot.slane %v1180, 1
    %v1182 = vadd.f32 %v1180, %v1181
    %v1183 = vsel %vm839, %v808, 0.0
    %v1184 = vrot.slane %v1183, 4
    %v1185 = vadd.f32 %v1183, %v1184
    %v1186 = vrot.slane %v1185, 2
    %v1187 = vadd.f32 %v1185, %v1186
    %v1188 = vrot.slane %v1187, 1
    %v1189 = vadd.f32 %v1187, %v1188
    %v1190 = vsel %vm839, %v809, 0.0
    %v1191 = vrot.slane %v1190, 4
    %v1192 = vadd.f32 %v1190, %v1191
    %v1193 = vrot.slane %v1192, 2
    %v1194 = vadd.f32 %v1192, %v1193
    %v1195 = vrot.slane %v1194, 1
    %v1196 = vadd.f32 %v1194, %v1195
    %v1197 = vsel %vm839, %v810, 0.0
    %v1198 = vrot.slane %v1197, 4
    %v1199 = vadd.f32 %v1197, %v1198
    %v1200 = vrot.slane %v1199, 2
    %v1201 = vadd.f32 %v1199, %v1200
    %v1202 = vrot.slane %v1201, 1
    %v1203 = vadd.f32 %v1201, %v1202
    %v1204 = vsel %vm839, %v811, 0.0
    %v1205 = vrot.slane %v1204, 4
    %v1206 = vadd.f32 %v1204, %v1205
    %v1207 = vrot.slane %v1206, 2
    %v1208 = vadd.f32 %v1206, %v1207
    %v1209 = vrot.slane %v1208, 1
    %v1210 = vadd.f32 %v1208, %v1209
    %v1211 = vsel %vm839, %v812, 0.0
    %v1212 = vrot.slane %v1211, 4
    %v1213 = vadd.f32 %v1211, %v1212
    %v1214 = vrot.slane %v1213, 2
    %v1215 = vadd.f32 %v1213, %v1214
    %v1216 = vrot.slane %v1215, 1
    %v1217 = vadd.f32 %v1215, %v1216
    %v1218 = vsel %vm839, %v813, 0.0
    %v1219 = vrot.slane %v1218, 4
    %v1220 = vadd.f32 %v1218, %v1219
    %v1221 = vrot.slane %v1220, 2
    %v1222 = vadd.f32 %v1220, %v1221
    %v1223 = vrot.slane %v1222, 1
    %v1224 = vadd.f32 %v1222, %v1223
    %v1225 = vsel %vm839, %v814, 0.0
    %v1226 = vrot.slane %v1225, 4
    %v1227 = vadd.f32 %v1225, %v1226
    %v1228 = vrot.slane %v1227, 2
    %v1229 = vadd.f32 %v1227, %v1228
    %v1230 = vrot.slane %v1229, 1
    %v1231 = vadd.f32 %v1229, %v1230
    %v1232 = vsel %vm839, %v815, 0.0
    %v1233 = vrot.slane %v1232, 4
    %v1234 = vadd.f32 %v1232, %v1233
    %v1235 = vrot.slane %v1234, 2
    %v1236 = vadd.f32 %v1234, %v1235
    %v1237 = vrot.slane %v1236, 1
    %v1238 = vadd.f32 %v1236, %v1237
    %v1239 = vsel %vm839, %v816, 0.0
    %v1240 = vrot.slane %v1239, 4
    %v1241 = vadd.f32 %v1239, %v1240
    %v1242 = vrot.slane %v1241, 2
    %v1243 = vadd.f32 %v1241, %v1242
    %v1244 = vrot.slane %v1243, 1
    %v1245 = vadd.f32 %v1243, %v1244
    %v1246 = vsel %vm839, %v817, 0.0
    %v1247 = vrot.slane %v1246, 4
    %v1248 = vadd.f32 %v1246, %v1247
    %v1249 = vrot.slane %v1248, 2
    %v1250 = vadd.f32 %v1248, %v1249
    %v1251 = vrot.slane %v1250, 1
    %v1252 = vadd.f32 %v1250, %v1251
    %v1253 = vsel %vm839, %v818, 0.0
    %v1254 = vrot.slane %v1253, 4
    %v1255 = vadd.f32 %v1253, %v1254
    %v1256 = vrot.slane %v1255, 2
    %v1257 = vadd.f32 %v1255, %v1256
    %v1258 = vrot.slane %v1257, 1
    %v1259 = vadd.f32 %v1257, %v1258
    %v1260 = vsel %vm839, %v819, 0.0
    %v1261 = vrot.slane %v1260, 4
    %v1262 = vadd.f32 %v1260, %v1261
    %v1263 = vrot.slane %v1262, 2
    %v1264 = vadd.f32 %v1262, %v1263
    %v1265 = vrot.slane %v1264, 1
    %v1266 = vadd.f32 %v1264, %v1265
    %v1267 = vsel %vm839, %v820, 0.0
    %v1268 = vrot.slane %v1267, 4
    %v1269 = vadd.f32 %v1267, %v1268
    %v1270 = vrot.slane %v1269, 2
    %v1271 = vadd.f32 %v1269, %v1270
    %v1272 = vrot.slane %v1271, 1
    %v1273 = vadd.f32 %v1271, %v1272
    %v1274 = vsel %vm839, %v821, 0.0
    %v1275 = vrot.slane %v1274, 4
    %v1276 = vadd.f32 %v1274, %v1275
    %v1277 = vrot.slane %v1276, 2
    %v1278 = vadd.f32 %v1276, %v1277
    %v1279 = vrot.slane %v1278, 1
    %v1280 = vadd.f32 %v1278, %v1279
    %v1281 = vsel %vm839, %v822, 0.0
    %v1282 = vrot.slane %v1281, 4
    %v1283 = vadd.f32 %v1281, %v1282
    %v1284 = vrot.slane %v1283, 2
    %v1285 = vadd.f32 %v1283, %v1284
    %v1286 = vrot.slane %v1285, 1
    %v1287 = vadd.f32 %v1285, %v1286
    %v1288 = vsel %vm839, %v823, 0.0
    %v1289 = vrot.slane %v1288, 4
    %v1290 = vadd.f32 %v1288, %v1289
    %v1291 = vrot.slane %v1290, 2
    %v1292 = vadd.f32 %v1290, %v1291
    %v1293 = vrot.slane %v1292, 1
    %v1294 = vadd.f32 %v1292, %v1293
    %v1295 = vsel %vm839, %v824, 0.0
    %v1296 = vrot.slane %v1295, 4
    %v1297 = vadd.f32 %v1295, %v1296
    %v1298 = vrot.slane %v1297, 2
    %v1299 = vadd.f32 %v1297, %v1298
    %v1300 = vrot.slane %v1299, 1
    %v1301 = vadd.f32 %v1299, %v1300
    %v1302 = vsel %vm839, %v825, 0.0
    %v1303 = vrot.slane %v1302, 4
    %v1304 = vadd.f32 %v1302, %v1303
    %v1305 = vrot.slane %v1304, 2
    %v1306 = vadd.f32 %v1304, %v1305
    %v1307 = vrot.slane %v1306, 1
    %v1308 = vadd.f32 %v1306, %v1307
    %v1309 = vsel %vm839, %v826, 0.0
    %v1310 = vrot.slane %v1309, 4
    %v1311 = vadd.f32 %v1309, %v1310
    %v1312 = vrot.slane %v1311, 2
    %v1313 = vadd.f32 %v1311, %v1312
    %v1314 = vrot.slane %v1313, 1
    %v1315 = vadd.f32 %v1313, %v1314
    %v1316 = vsel %vm839, %v827, 0.0
    %v1317 = vrot.slane %v1316, 4
    %v1318 = vadd.f32 %v1316, %v1317
    %v1319 = vrot.slane %v1318, 2
    %v1320 = vadd.f32 %v1318, %v1319
    %v1321 = vrot.slane %v1320, 1
    %v1322 = vadd.f32 %v1320, %v1321
    %v1323 = vsel %vm839, %v828, 0.0
    %v1324 = vrot.slane %v1323, 4
    %v1325 = vadd.f32 %v1323, %v1324
    %v1326 = vrot.slane %v1325, 2
    %v1327 = vadd.f32 %v1325, %v1326
    %v1328 = vrot.slane %v1327, 1
    %v1329 = vadd.f32 %v1327, %v1328
    %v1330 = vsel %vm839, %v829, 0.0
    %v1331 = vrot.slane %v1330, 4
    %v1332 = vadd.f32 %v1330, %v1331
    %v1333 = vrot.slane %v1332, 2
    %v1334 = vadd.f32 %v1332, %v1333
    %v1335 = vrot.slane %v1334, 1
    %v1336 = vadd.f32 %v1334, %v1335
    %v1337 = vsel %vm839, %v830, 0.0
    %v1338 = vrot.slane %v1337, 4
    %v1339 = vadd.f32 %v1337, %v1338
    %v1340 = vrot.slane %v1339, 2
    %v1341 = vadd.f32 %v1339, %v1340
    %v1342 = vrot.slane %v1341, 1
    %v1343 = vadd.f32 %v1341, %v1342
    %v1344 = vsel %vm839, %v831, 0.0
    %v1345 = vrot.slane %v1344, 4
    %v1346 = vadd.f32 %v1344, %v1345
    %v1347 = vrot.slane %v1346, 2
    %v1348 = vadd.f32 %v1346, %v1347
    %v1349 = vrot.slane %v1348, 1
    %v1350 = vadd.f32 %v1348, %v1349
    %v1351 = vsel %vm839, %v832, 0.0
    %v1352 = vrot.slane %v1351, 4
    %v1353 = vadd.f32 %v1351, %v1352
    %v1354 = vrot.slane %v1353, 2
    %v1355 = vadd.f32 %v1353, %v1354
    %v1356 = vrot.slane %v1355, 1
    %v1357 = vadd.f32 %v1355, %v1356
    %v1358 = vsel %vm839, %v833, 0.0
    %v1359 = vrot.slane %v1358, 4
    %v1360 = vadd.f32 %v1358, %v1359
    %v1361 = vrot.slane %v1360, 2
    %v1362 = vadd.f32 %v1360, %v1361
    %v1363 = vrot.slane %v1362, 1
    %v1364 = vadd.f32 %v1362, %v1363
    %v1365 = vsel %vm839, %v834, 0.0
    %v1366 = vrot.slane %v1365, 4
    %v1367 = vadd.f32 %v1365, %v1366
    %v1368 = vrot.slane %v1367, 2
    %v1369 = vadd.f32 %v1367, %v1368
    %v1370 = vrot.slane %v1369, 1
    %v1371 = vadd.f32 %v1369, %v1370
    %v1372 = vsel %vm839, %v835, 0.0
    %v1373 = vrot.slane %v1372, 4
    %v1374 = vadd.f32 %v1372, %v1373
    %v1375 = vrot.slane %v1374, 2
    %v1376 = vadd.f32 %v1374, %v1375
    %v1377 = vrot.slane %v1376, 1
    %v1378 = vadd.f32 %v1376, %v1377
    %v1379 = vsel %vm839, %v836, 0.0
    %v1380 = vrot.slane %v1379, 4
    %v1381 = vadd.f32 %v1379, %v1380
    %v1382 = vrot.slane %v1381, 2
    %v1383 = vadd.f32 %v1381, %v1382
    %v1384 = vrot.slane %v1383, 1
    %v1385 = vadd.f32 %v1383, %v1384
    %v1386 = vsel %vm839, %v837, 0.0
    %v1387 = vrot.slane %v1386, 4
    %v1388 = vadd.f32 %v1386, %v1387
    %v1389 = vrot.slane %v1388, 2
    %v1390 = vadd.f32 %v1388, %v1389
    %v1391 = vrot.slane %v1390, 1
    %v1392 = vadd.f32 %v1390, %v1391
    %v1393 = vsel %vm839, %v838, 0.0
    %v1394 = vrot.slane %v1393, 4
    %v1395 = vadd.f32 %v1393, %v1394
    %v1396 = vrot.slane %v1395, 2
    %v1397 = vadd.f32 %v1395, %v1396
    %v1398 = vrot.slane %v1397, 1
    %v1399 = vadd.f32 %v1397, %v1398
    %vm1400 = vcmask 31744
    %v1401 = vsel %vm1400, %v27, 0.0
    %1402 = vadd.xlane.f32.xlu0 %v1401
    %v1403 = vpop.xlane.xlu0 %1402
    %v1404 = vsel %vm1400, %v28, 0.0
    %1405 = vadd.xlane.f32.xlu0 %v1404
    %v1406 = vpop.xlane.xlu0 %1405
    %vm1407 = vcmask 27648
    %v1408 = vsel %vm1407, %v29, 0.0
    %1409 = vadd.xlane.f32.xlu0 %v1408
    %v1410 = vpop.xlane.xlu0 %1409
    %v1411 = vsel %vm1400, %v30, 0.0
    %1412 = vadd.xlane.f32.xlu0 %v1411
    %v1413 = vpop.xlane.xlu0 %1412
    %v1414 = vsel %vm1400, %v31, 0.0
    %1415 = vadd.xlane.f32.xlu0 %v1414
    %v1416 = vpop.xlane.xlu0 %1415
    %v1417 = vsel %vm1407, %v32, 0.0
    %1418 = vadd.xlane.f32.xlu0 %v1417
    %v1419 = vpop.xlane.xlu0 %1418
    %v1420 = vsel %vm1400, %v33, 0.0
    %1421 = vadd.xlane.f32.xlu0 %v1420
    %v1422 = vpop.xlane.xlu0 %1421
    %v1423 = vsel %vm1400, %v34, 0.0
    %1424 = vadd.xlane.f32.xlu0 %v1423
    %v1425 = vpop.xlane.xlu0 %1424
    %v1426 = vsel %vm1407, %v35, 0.0
    %1427 = vadd.xlane.f32.xlu0 %v1426
    %v1428 = vpop.xlane.xlu0 %1427
    %v1429 = vsel %vm1400, %v36, 0.0
    %1430 = vadd.xlane.f32.xlu0 %v1429
    %v1431 = vpop.xlane.xlu0 %1430
    %v1432 = vsel %vm1400, %v37, 0.0
    %1433 = vadd.xlane.f32.xlu0 %v1432
    %v1434 = vpop.xlane.xlu0 %1433
    %v1435 = vsel %vm1407, %v38, 0.0
    %1436 = vadd.xlane.f32.xlu0 %v1435
    %v1437 = vpop.xlane.xlu0 %1436
    %v1438 = vadd.f32 %v1403, 1e-10
    %v1439 = vadd.f32 %v1406, 1e-10
    %v1440 = vadd.f32 %v1410, 1e-10
    %v1441 = vadd.f32 %v1413, 1e-10
    %v1442 = vadd.f32 %v1416, 1e-10
    %v1443 = vadd.f32 %v1419, 1e-10
    %v1444 = vadd.f32 %v1422, 1e-10
    %v1445 = vadd.f32 %v1425, 1e-10
    %v1446 = vadd.f32 %v1428, 1e-10
    %v1447 = vadd.f32 %v1431, 1e-10
    %v1448 = vadd.f32 %v1434, 1e-10
    %v1449 = vadd.f32 %v1437, 1e-10
    %v1450 = vrcp.pop %v1438
    %v1451 = vrcp.pop %v1439
    %v1452 = vrcp.pop %v1440
    %v1453 = vrcp.pop %v1441
    %v1454 = vrcp.pop %v1442
    %v1455 = vrcp.pop %v1443
    %v1456 = vrcp.pop %v1444
    %v1457 = vrcp.pop %v1445
    %v1458 = vrcp.pop %v1446
    %v1459 = vrcp.pop %v1447
    %v1460 = vrcp.pop %v1448
    %v1461 = vrcp.pop %v1449
    %v1474 = vrot.slane %v1450, 1
    %v1475 = vrot.slane %v1450, 2
    %v1476 = vrot.slane %v1450, 3
    %v1477 = vrot.slane %v1450, 4
    %v1478 = vrot.slane %v1450, 5
    %v1479 = vrot.slane %v1450, 6
    %v1480 = vrot.slane %v1450, 7
    %v1481 = vrot.slane %v1451, 1
    %v1482 = vrot.slane %v1451, 2
    %v1483 = vrot.slane %v1451, 3
    %v1484 = vrot.slane %v1451, 4
    %v1485 = vrot.slane %v1451, 5
    %v1486 = vrot.slane %v1451, 6
    %v1487 = vrot.slane %v1451, 7
    %v1488 = vrot.slane %v1452, 1
    %v1489 = vrot.slane %v1452, 2
    %v1490 = vrot.slane %v1452, 3
    %v1491 = vrot.slane %v1453, 1
    %v1492 = vrot.slane %v1453, 2
    %v1493 = vrot.slane %v1453, 3
    %v1494 = vrot.slane %v1453, 4
    %v1495 = vrot.slane %v1453, 5
    %v1496 = vrot.slane %v1453, 6
    %v1497 = vrot.slane %v1453, 7
    %v1498 = vrot.slane %v1454, 1
    %v1499 = vrot.slane %v1454, 2
    %v1500 = vrot.slane %v1454, 3
    %v1501 = vrot.slane %v1454, 4
    %v1502 = vrot.slane %v1454, 5
    %v1503 = vrot.slane %v1454, 6
    %v1504 = vrot.slane %v1454, 7
    %v1505 = vrot.slane %v1455, 1
    %v1506 = vrot.slane %v1455, 2
    %v1507 = vrot.slane %v1455, 3
    %v1508 = vrot.slane %v1456, 1
    %v1509 = vrot.slane %v1456, 2
    %v1510 = vrot.slane %v1456, 3
    %v1511 = vrot.slane %v1456, 4
    %v1512 = vrot.slane %v1456, 5
    %v1513 = vrot.slane %v1456, 6
    %v1514 = vrot.slane %v1456, 7
    %v1515 = vrot.slane %v1457, 1
    %v1516 = vrot.slane %v1457, 2
    %v1517 = vrot.slane %v1457, 3
    %v1518 = vrot.slane %v1457, 4
    %v1519 = vrot.slane %v1457, 5
    %v1520 = vrot.slane %v1457, 6
    %v1521 = vrot.slane %v1457, 7
    %v1522 = vrot.slane %v1458, 1
    %v1523 = vrot.slane %v1458, 2
    %v1524 = vrot.slane %v1458, 3
    %v1525 = vrot.slane %v1459, 1
    %v1526 = vrot.slane %v1459, 2
    %v1527 = vrot.slane %v1459, 3
    %v1528 = vrot.slane %v1459, 4
    %v1529 = vrot.slane %v1459, 5
    %v1530 = vrot.slane %v1459, 6
    %v1531 = vrot.slane %v1459, 7
    %v1532 = vrot.slane %v1460, 1
    %v1533 = vrot.slane %v1460, 2
    %v1534 = vrot.slane %v1460, 3
    %v1535 = vrot.slane %v1460, 4
    %v1536 = vrot.slane %v1460, 5
    %v1537 = vrot.slane %v1460, 6
    %v1538 = vrot.slane %v1460, 7
    %v1539 = vrot.slane %v1461, 1
    %v1540 = vrot.slane %v1461, 2
    %v1541 = vrot.slane %v1461, 3
    %v1622 = vmul.f32 %v846, %v1450
    %v1623 = vmul.f32 %v853, %v1474
    %v1624 = vmul.f32 %v860, %v1475
    %v1625 = vmul.f32 %v867, %v1476
    %v1626 = vmul.f32 %v874, %v1477
    %v1627 = vmul.f32 %v881, %v1478
    %v1628 = vmul.f32 %v888, %v1479
    %v1629 = vmul.f32 %v895, %v1480
    %v1630 = vmul.f32 %v902, %v1451
    %v1631 = vmul.f32 %v909, %v1481
    %v1632 = vmul.f32 %v916, %v1482
    %v1633 = vmul.f32 %v923, %v1483
    %v1634 = vmul.f32 %v930, %v1484
    %v1635 = vmul.f32 %v937, %v1485
    %v1636 = vmul.f32 %v944, %v1486
    %v1637 = vmul.f32 %v951, %v1487
    %v1638 = vmul.f32 %v958, %v1452
    %v1639 = vmul.f32 %v965, %v1488
    %v1640 = vmul.f32 %v972, %v1489
    %v1641 = vmul.f32 %v979, %v1490
    %v1642 = vmul.f32 %v986, %v1453
    %v1643 = vmul.f32 %v993, %v1491
    %v1644 = vmul.f32 %v1000, %v1492
    %v1645 = vmul.f32 %v1007, %v1493
    %v1646 = vmul.f32 %v1014, %v1494
    %v1647 = vmul.f32 %v1021, %v1495
    %v1648 = vmul.f32 %v1028, %v1496
    %v1649 = vmul.f32 %v1035, %v1497
    %v1650 = vmul.f32 %v1042, %v1454
    %v1651 = vmul.f32 %v1049, %v1498
    %v1652 = vmul.f32 %v1056, %v1499
    %v1653 = vmul.f32 %v1063, %v1500
    %v1654 = vmul.f32 %v1070, %v1501
    %v1655 = vmul.f32 %v1077, %v1502
    %v1656 = vmul.f32 %v1084, %v1503
    %v1657 = vmul.f32 %v1091, %v1504
    %v1658 = vmul.f32 %v1098, %v1455
    %v1659 = vmul.f32 %v1105, %v1505
    %v1660 = vmul.f32 %v1112, %v1506
    %v1661 = vmul.f32 %v1119, %v1507
    %v1662 = vmul.f32 %v1126, %v1456
    %v1663 = vmul.f32 %v1133, %v1508
    %v1664 = vmul.f32 %v1140, %v1509
    %v1665 = vmul.f32 %v1147, %v1510
    %v1666 = vmul.f32 %v1154, %v1511
    %v1667 = vmul.f32 %v1161, %v1512
    %v1668 = vmul.f32 %v1168, %v1513
    %v1669 = vmul.f32 %v1175, %v1514
    %v1670 = vmul.f32 %v1182, %v1457
    %v1671 = vmul.f32 %v1189, %v1515
    %v1672 = vmul.f32 %v1196, %v1516
    %v1673 = vmul.f32 %v1203, %v1517
    %v1674 = vmul.f32 %v1210, %v1518
    %v1675 = vmul.f32 %v1217, %v1519
    %v1676 = vmul.f32 %v1224, %v1520
    %v1677 = vmul.f32 %v1231, %v1521
    %v1678 = vmul.f32 %v1238, %v1458
    %v1679 = vmul.f32 %v1245, %v1522
    %v1680 = vmul.f32 %v1252, %v1523
    %v1681 = vmul.f32 %v1259, %v1524
    %v1682 = vmul.f32 %v1266, %v1459
    %v1683 = vmul.f32 %v1273, %v1525
    %v1684 = vmul.f32 %v1280, %v1526
    %v1685 = vmul.f32 %v1287, %v1527
    %v1686 = vmul.f32 %v1294, %v1528
    %v1687 = vmul.f32 %v1301, %v1529
    %v1688 = vmul.f32 %v1308, %v1530
    %v1689 = vmul.f32 %v1315, %v1531
    %v1690 = vmul.f32 %v1322, %v1460
    %v1691 = vmul.f32 %v1329, %v1532
    %v1692 = vmul.f32 %v1336, %v1533
    %v1693 = vmul.f32 %v1343, %v1534
    %v1694 = vmul.f32 %v1350, %v1535
    %v1695 = vmul.f32 %v1357, %v1536
    %v1696 = vmul.f32 %v1364, %v1537
    %v1697 = vmul.f32 %v1371, %v1538
    %v1698 = vmul.f32 %v1378, %v1461
    %v1699 = vmul.f32 %v1385, %v1539
    %v1700 = vmul.f32 %v1392, %v1540
    %v1701 = vmul.f32 %v1399, %v1541
    %v1702 = vpack.c.bf16 %v1622, %v1622
    %v1703 = vpack.c.bf16 %v1623, %v1623
    %v1704 = vpack.c.bf16 %v1624, %v1624
    %v1705 = vpack.c.bf16 %v1625, %v1625
    %v1706 = vpack.c.bf16 %v1626, %v1626
    %v1707 = vpack.c.bf16 %v1627, %v1627
    %v1708 = vpack.c.bf16 %v1628, %v1628
    %v1709 = vpack.c.bf16 %v1629, %v1629
    %v1710 = vpack.c.bf16 %v1630, %v1630
    %v1711 = vpack.c.bf16 %v1631, %v1631
    %v1712 = vpack.c.bf16 %v1632, %v1632
    %v1713 = vpack.c.bf16 %v1633, %v1633
    %v1714 = vpack.c.bf16 %v1634, %v1634
    %v1715 = vpack.c.bf16 %v1635, %v1635
    %v1716 = vpack.c.bf16 %v1636, %v1636
    %v1717 = vpack.c.bf16 %v1637, %v1637
    %v1718 = vpack.c.bf16 %v1638, %v1638
    %v1719 = vpack.c.bf16 %v1639, %v1639
    %v1720 = vpack.c.bf16 %v1640, %v1640
    %v1721 = vpack.c.bf16 %v1641, %v1641
    %v1722 = vpack.c.bf16 %v1642, %v1642
    %v1723 = vpack.c.bf16 %v1643, %v1643
    %v1724 = vpack.c.bf16 %v1644, %v1644
    %v1725 = vpack.c.bf16 %v1645, %v1645
    %v1726 = vpack.c.bf16 %v1646, %v1646
    %v1727 = vpack.c.bf16 %v1647, %v1647
    %v1728 = vpack.c.bf16 %v1648, %v1648
    %v1729 = vpack.c.bf16 %v1649, %v1649
    %v1730 = vpack.c.bf16 %v1650, %v1650
    %v1731 = vpack.c.bf16 %v1651, %v1651
    %v1732 = vpack.c.bf16 %v1652, %v1652
    %v1733 = vpack.c.bf16 %v1653, %v1653
    %v1734 = vpack.c.bf16 %v1654, %v1654
    %v1735 = vpack.c.bf16 %v1655, %v1655
    %v1736 = vpack.c.bf16 %v1656, %v1656
    %v1737 = vpack.c.bf16 %v1657, %v1657
    %v1738 = vpack.c.bf16 %v1658, %v1658
    %v1739 = vpack.c.bf16 %v1659, %v1659
    %v1740 = vpack.c.bf16 %v1660, %v1660
    %v1741 = vpack.c.bf16 %v1661, %v1661
    %v1742 = vpack.c.bf16 %v1662, %v1662
    %v1743 = vpack.c.bf16 %v1663, %v1663
    %v1744 = vpack.c.bf16 %v1664, %v1664
    %v1745 = vpack.c.bf16 %v1665, %v1665
    %v1746 = vpack.c.bf16 %v1666, %v1666
    %v1747 = vpack.c.bf16 %v1667, %v1667
    %v1748 = vpack.c.bf16 %v1668, %v1668
    %v1749 = vpack.c.bf16 %v1669, %v1669
    %v1750 = vpack.c.bf16 %v1670, %v1670
    %v1751 = vpack.c.bf16 %v1671, %v1671
    %v1752 = vpack.c.bf16 %v1672, %v1672
    %v1753 = vpack.c.bf16 %v1673, %v1673
    %v1754 = vpack.c.bf16 %v1674, %v1674
    %v1755 = vpack.c.bf16 %v1675, %v1675
    %v1756 = vpack.c.bf16 %v1676, %v1676
    %v1757 = vpack.c.bf16 %v1677, %v1677
    %v1758 = vpack.c.bf16 %v1678, %v1678
    %v1759 = vpack.c.bf16 %v1679, %v1679
    %v1760 = vpack.c.bf16 %v1680, %v1680
    %v1761 = vpack.c.bf16 %v1681, %v1681
    %v1762 = vpack.c.bf16 %v1682, %v1682
    %v1763 = vpack.c.bf16 %v1683, %v1683
    %v1764 = vpack.c.bf16 %v1684, %v1684
    %v1765 = vpack.c.bf16 %v1685, %v1685
    %v1766 = vpack.c.bf16 %v1686, %v1686
    %v1767 = vpack.c.bf16 %v1687, %v1687
    %v1768 = vpack.c.bf16 %v1688, %v1688
    %v1769 = vpack.c.bf16 %v1689, %v1689
    %v1770 = vpack.c.bf16 %v1690, %v1690
    %v1771 = vpack.c.bf16 %v1691, %v1691
    %v1772 = vpack.c.bf16 %v1692, %v1692
    %v1773 = vpack.c.bf16 %v1693, %v1693
    %v1774 = vpack.c.bf16 %v1694, %v1694
    %v1775 = vpack.c.bf16 %v1695, %v1695
    %v1776 = vpack.c.bf16 %v1696, %v1696
    %v1777 = vpack.c.bf16 %v1697, %v1697
    %v1778 = vpack.c.bf16 %v1698, %v1698
    %v1779 = vpack.c.bf16 %v1699, %v1699
    %v1780 = vpack.c.bf16 %v1700, %v1700
    %v1781 = vpack.c.bf16 %v1701, %v1701
    %v1862 = vunpack.c.l.b16 %v1702
    %v1863 = vunpack.c.l.b16 %v1703
    %v1864 = vunpack.c.l.b16 %v1704
    %v1865 = vunpack.c.l.b16 %v1705
    %v1866 = vunpack.c.l.b16 %v1706
    %v1867 = vunpack.c.l.b16 %v1707
    %v1868 = vunpack.c.l.b16 %v1708
    %v1869 = vunpack.c.l.b16 %v1709
    %v1870 = vunpack.c.l.b16 %v1710
    %v1871 = vunpack.c.l.b16 %v1711
    %v1872 = vunpack.c.l.b16 %v1712
    %v1873 = vunpack.c.l.b16 %v1713
    %v1874 = vunpack.c.l.b16 %v1714
    %v1875 = vunpack.c.l.b16 %v1715
    %v1876 = vunpack.c.l.b16 %v1716
    %v1877 = vunpack.c.l.b16 %v1717
    %v1878 = vunpack.c.l.b16 %v1718
    %v1879 = vunpack.c.l.b16 %v1719
    %v1880 = vunpack.c.l.b16 %v1720
    %v1881 = vunpack.c.l.b16 %v1721
    %v1882 = vunpack.c.l.b16 %v1722
    %v1883 = vunpack.c.l.b16 %v1723
    %v1884 = vunpack.c.l.b16 %v1724
    %v1885 = vunpack.c.l.b16 %v1725
    %v1886 = vunpack.c.l.b16 %v1726
    %v1887 = vunpack.c.l.b16 %v1727
    %v1888 = vunpack.c.l.b16 %v1728
    %v1889 = vunpack.c.l.b16 %v1729
    %v1890 = vunpack.c.l.b16 %v1730
    %v1891 = vunpack.c.l.b16 %v1731
    %v1892 = vunpack.c.l.b16 %v1732
    %v1893 = vunpack.c.l.b16 %v1733
    %v1894 = vunpack.c.l.b16 %v1734
    %v1895 = vunpack.c.l.b16 %v1735
    %v1896 = vunpack.c.l.b16 %v1736
    %v1897 = vunpack.c.l.b16 %v1737
    %v1898 = vunpack.c.l.b16 %v1738
    %v1899 = vunpack.c.l.b16 %v1739
    %v1900 = vunpack.c.l.b16 %v1740
    %v1901 = vunpack.c.l.b16 %v1741
    %v1902 = vunpack.c.l.b16 %v1742
    %v1903 = vunpack.c.l.b16 %v1743
    %v1904 = vunpack.c.l.b16 %v1744
    %v1905 = vunpack.c.l.b16 %v1745
    %v1906 = vunpack.c.l.b16 %v1746
    %v1907 = vunpack.c.l.b16 %v1747
    %v1908 = vunpack.c.l.b16 %v1748
    %v1909 = vunpack.c.l.b16 %v1749
    %v1910 = vunpack.c.l.b16 %v1750
    %v1911 = vunpack.c.l.b16 %v1751
    %v1912 = vunpack.c.l.b16 %v1752
    %v1913 = vunpack.c.l.b16 %v1753
    %v1914 = vunpack.c.l.b16 %v1754
    %v1915 = vunpack.c.l.b16 %v1755
    %v1916 = vunpack.c.l.b16 %v1756
    %v1917 = vunpack.c.l.b16 %v1757
    %v1918 = vunpack.c.l.b16 %v1758
    %v1919 = vunpack.c.l.b16 %v1759
    %v1920 = vunpack.c.l.b16 %v1760
    %v1921 = vunpack.c.l.b16 %v1761
    %v1922 = vunpack.c.l.b16 %v1762
    %v1923 = vunpack.c.l.b16 %v1763
    %v1924 = vunpack.c.l.b16 %v1764
    %v1925 = vunpack.c.l.b16 %v1765
    %v1926 = vunpack.c.l.b16 %v1766
    %v1927 = vunpack.c.l.b16 %v1767
    %v1928 = vunpack.c.l.b16 %v1768
    %v1929 = vunpack.c.l.b16 %v1769
    %v1930 = vunpack.c.l.b16 %v1770
    %v1931 = vunpack.c.l.b16 %v1771
    %v1932 = vunpack.c.l.b16 %v1772
    %v1933 = vunpack.c.l.b16 %v1773
    %v1934 = vunpack.c.l.b16 %v1774
    %v1935 = vunpack.c.l.b16 %v1775
    %v1936 = vunpack.c.l.b16 %v1776
    %v1937 = vunpack.c.l.b16 %v1777
    %v1938 = vunpack.c.l.b16 %v1778
    %v1939 = vunpack.c.l.b16 %v1779
    %v1940 = vunpack.c.l.b16 %v1780
    %v1941 = vunpack.c.l.b16 %v1781
    %v1942 = vrot.slane %v1863, 7
    %vm1943 = vcmask 1041409
    %v1944 = vsel %vm1943, %v1942, %v1862
    %v1945 = vrot.slane %v1864, 6
    %vm1946 = vcmask 1042434
    %v1947 = vsel %vm1946, %v1945, %v1944
    %v1948 = vrot.slane %v1865, 5
    %vm1949 = vcmask 1043459
    %v1950 = vsel %vm1949, %v1948, %v1947
    %v1951 = vrot.slane %v1866, 4
    %vm1952 = vcmask 1044484
    %v1953 = vsel %vm1952, %v1951, %v1950
    %v1954 = vrot.slane %v1867, 3
    %vm1955 = vcmask 1045509
    %v1956 = vsel %vm1955, %v1954, %v1953
    %v1957 = vrot.slane %v1868, 2
    %vm1958 = vcmask 1046534
    %v1959 = vsel %vm1958, %v1957, %v1956
    %v1960 = vrot.slane %v1869, 1
    %vm1961 = vcmask 1047559
    %v1962 = vsel %vm1961, %v1960, %v1959
    %v1963 = vrot.slane %v1871, 7
    %v1964 = vsel %vm1943, %v1963, %v1870
    %v1965 = vrot.slane %v1872, 6
    %v1966 = vsel %vm1946, %v1965, %v1964
    %v1967 = vrot.slane %v1873, 5
    %v1968 = vsel %vm1949, %v1967, %v1966
    %v1969 = vrot.slane %v1874, 4
    %v1970 = vsel %vm1952, %v1969, %v1968
    %v1971 = vrot.slane %v1875, 3
    %v1972 = vsel %vm1955, %v1971, %v1970
    %v1973 = vrot.slane %v1876, 2
    %v1974 = vsel %vm1958, %v1973, %v1972
    %v1975 = vrot.slane %v1877, 1
    %v1976 = vsel %vm1961, %v1975, %v1974
    %v1977 = vrot.slane %v1879, 7
    %v1978 = vsel %vm1943, %v1977, %v1878
    %v1979 = vrot.slane %v1880, 6
    %v1980 = vsel %vm1946, %v1979, %v1978
    %v1981 = vrot.slane %v1881, 5
    %v1982 = vsel %vm1949, %v1981, %v1980
    %v1983 = vrot.slane %v1883, 7
    %v1984 = vsel %vm1943, %v1983, %v1882
    %v1985 = vrot.slane %v1884, 6
    %v1986 = vsel %vm1946, %v1985, %v1984
    %v1987 = vrot.slane %v1885, 5
    %v1988 = vsel %vm1949, %v1987, %v1986
    %v1989 = vrot.slane %v1886, 4
    %v1990 = vsel %vm1952, %v1989, %v1988
    %v1991 = vrot.slane %v1887, 3
    %v1992 = vsel %vm1955, %v1991, %v1990
    %v1993 = vrot.slane %v1888, 2
    %v1994 = vsel %vm1958, %v1993, %v1992
    %v1995 = vrot.slane %v1889, 1
    %v1996 = vsel %vm1961, %v1995, %v1994
    %v1997 = vrot.slane %v1891, 7
    %v1998 = vsel %vm1943, %v1997, %v1890
    %v1999 = vrot.slane %v1892, 6
    %v2000 = vsel %vm1946, %v1999, %v1998
    %v2001 = vrot.slane %v1893, 5
    %v2002 = vsel %vm1949, %v2001, %v2000
    %v2003 = vrot.slane %v1894, 4
    %v2004 = vsel %vm1952, %v2003, %v2002
    %v2005 = vrot.slane %v1895, 3
    %v2006 = vsel %vm1955, %v2005, %v2004
    %v2007 = vrot.slane %v1896, 2
    %v2008 = vsel %vm1958, %v2007, %v2006
    %v2009 = vrot.slane %v1897, 1
    %v2010 = vsel %vm1961, %v2009, %v2008
    %v2011 = vrot.slane %v1899, 7
    %v2012 = vsel %vm1943, %v2011, %v1898
    %v2013 = vrot.slane %v1900, 6
    %v2014 = vsel %vm1946, %v2013, %v2012
    %v2015 = vrot.slane %v1901, 5
    %v2016 = vsel %vm1949, %v2015, %v2014
    %v2017 = vrot.slane %v1903, 7
    %v2018 = vsel %vm1943, %v2017, %v1902
    %v2019 = vrot.slane %v1904, 6
    %v2020 = vsel %vm1946, %v2019, %v2018
    %v2021 = vrot.slane %v1905, 5
    %v2022 = vsel %vm1949, %v2021, %v2020
    %v2023 = vrot.slane %v1906, 4
    %v2024 = vsel %vm1952, %v2023, %v2022
    %v2025 = vrot.slane %v1907, 3
    %v2026 = vsel %vm1955, %v2025, %v2024
    %v2027 = vrot.slane %v1908, 2
    %v2028 = vsel %vm1958, %v2027, %v2026
    %v2029 = vrot.slane %v1909, 1
    %v2030 = vsel %vm1961, %v2029, %v2028
    %v2031 = vrot.slane %v1911, 7
    %v2032 = vsel %vm1943, %v2031, %v1910
    %v2033 = vrot.slane %v1912, 6
    %v2034 = vsel %vm1946, %v2033, %v2032
    %v2035 = vrot.slane %v1913, 5
    %v2036 = vsel %vm1949, %v2035, %v2034
    %v2037 = vrot.slane %v1914, 4
    %v2038 = vsel %vm1952, %v2037, %v2036
    %v2039 = vrot.slane %v1915, 3
    %v2040 = vsel %vm1955, %v2039, %v2038
    %v2041 = vrot.slane %v1916, 2
    %v2042 = vsel %vm1958, %v2041, %v2040
    %v2043 = vrot.slane %v1917, 1
    %v2044 = vsel %vm1961, %v2043, %v2042
    %v2045 = vrot.slane %v1919, 7
    %v2046 = vsel %vm1943, %v2045, %v1918
    %v2047 = vrot.slane %v1920, 6
    %v2048 = vsel %vm1946, %v2047, %v2046
    %v2049 = vrot.slane %v1921, 5
    %v2050 = vsel %vm1949, %v2049, %v2048
    %v2051 = vrot.slane %v1923, 7
    %v2052 = vsel %vm1943, %v2051, %v1922
    %v2053 = vrot.slane %v1924, 6
    %v2054 = vsel %vm1946, %v2053, %v2052
    %v2055 = vrot.slane %v1925, 5
    %v2056 = vsel %vm1949, %v2055, %v2054
    %v2057 = vrot.slane %v1926, 4
    %v2058 = vsel %vm1952, %v2057, %v2056
    %v2059 = vrot.slane %v1927, 3
    %v2060 = vsel %vm1955, %v2059, %v2058
    %v2061 = vrot.slane %v1928, 2
    %v2062 = vsel %vm1958, %v2061, %v2060
    %v2063 = vrot.slane %v1929, 1
    %v2064 = vsel %vm1961, %v2063, %v2062
    %v2065 = vrot.slane %v1931, 7
    %v2066 = vsel %vm1943, %v2065, %v1930
    %v2067 = vrot.slane %v1932, 6
    %v2068 = vsel %vm1946, %v2067, %v2066
    %v2069 = vrot.slane %v1933, 5
    %v2070 = vsel %vm1949, %v2069, %v2068
    %v2071 = vrot.slane %v1934, 4
    %v2072 = vsel %vm1952, %v2071, %v2070
    %v2073 = vrot.slane %v1935, 3
    %v2074 = vsel %vm1955, %v2073, %v2072
    %v2075 = vrot.slane %v1936, 2
    %v2076 = vsel %vm1958, %v2075, %v2074
    %v2077 = vrot.slane %v1937, 1
    %v2078 = vsel %vm1961, %v2077, %v2076
    %v2079 = vrot.slane %v1939, 7
    %v2080 = vsel %vm1943, %v2079, %v1938
    %v2081 = vrot.slane %v1940, 6
    %v2082 = vsel %vm1946, %v2081, %v2080
    %v2083 = vrot.slane %v1941, 5
    %v2084 = vsel %vm1949, %v2083, %v2082
    %v2085 = vpack.c.b16 %v1962, %v1962
    %v2086 = vpack.c.b16 %v1976, %v1976
    %v2087 = vpack.c.b16 %v1982, %v1982
    %v2088 = vpack.c.b16 %v1996, %v1996
    %v2089 = vpack.c.b16 %v2010, %v2010
    %v2090 = vpack.c.b16 %v2016, %v2016
    %v2091 = vpack.c.b16 %v2030, %v2030
    %v2092 = vpack.c.b16 %v2044, %v2044
    %v2093 = vpack.c.b16 %v2050, %v2050
    %v2094 = vpack.c.b16 %v2064, %v2064
    %v2095 = vpack.c.b16 %v2078, %v2078
    %v2096 = vpack.c.b16 %v2084, %v2084
    %2109 = vst.msk [vmem:[%s2] sm:$0xf] %vm839, %v2085
    %2110 = vst.msk [vmem:[%s2 + $0x4] sm:$0xf] %vm839, %v2086
    %vm2111 = vcmask 254976
    %2112 = vst.msk [vmem:[%s2 + $0x8] sm:$0x3] %vm2111, %v2087
    %2113 = vst.msk [vmem:[%s2 + $0xc] sm:$0xf] %vm839, %v2088
    %2114 = vst.msk [vmem:[%s2 + $0x10] sm:$0xf] %vm839, %v2089
    %2115 = vst.msk [vmem:[%s2 + $0x14] sm:$0x3] %vm2111, %v2090
    %2116 = vst.msk [vmem:[%s2 + $0x18] sm:$0xf] %vm839, %v2091
    %2117 = vst.msk [vmem:[%s2 + $0x1c] sm:$0xf] %vm839, %v2092
    %2118 = vst.msk [vmem:[%s2 + $0x20] sm:$0x3] %vm2111, %v2093
    %2119 = vst.msk [vmem:[%s2 + $0x24] sm:$0xf] %vm839, %v2094
    %2120 = vst.msk [vmem:[%s2 + $0x28] sm:$0xf] %vm839, %v2095
    %2121 = vst.msk [vmem:[%s2 + $0x2c] sm:$0x3] %vm2111, %v2096
    // Predicated region
    $region14: #{tpu_custom_call.1} parent=1 // pred_check
      _
    $region15: #{tpu_custom_call.1} parent=1 // pred_check_branch
      %2123 = sbr.rel (0) target = $region17
    $region16: #{tpu_custom_call.1} parent=1 // pred_region
      _
    $region17: #{tpu_custom_call.1} parent=1 // pred_fallthru
      _
    // Predicated region
    $region18: #{tpu_custom_call.1} parent=1 // pred_check
      _
    $region19: #{tpu_custom_call.1} parent=1 // pred_check_branch
      %2125 = sbr.rel (0) target = $region21
    $region20: #{tpu_custom_call.1} parent=1 // pred_region
      _
    $region21: #{tpu_custom_call.1} parent=1 // pred_fallthru
      _
    %2126 = vsyncpa [#allocation3], 1

</llo_original>
